<compile_context>
chip_gen: v6e
topology: v6e:2x2x1
jax: 0.10.0
libtpu: 0.0.40
codegen_flags: <defaults>
</compile_context>

<pallas_src>
import functools
import math

import jax
import jax.numpy as jnp
from jax.experimental import pallas as pl
from jax.experimental.pallas import tpu as pltpu

NEG_SLOPE = 0.01   # nn.LeakyReLU default negative_slope
BN_EPS = 1e-5      # nn.BatchNorm2d default eps


def _leaky(x):
    return jnp.where(x > 0, x, NEG_SLOPE * x)


def encoder_block_kernel(x_ref, mask_ref, w1_ref, b1_ref, wd_ref, b2_ref, sel_ref,
                         x_out_ref, p_out_ref, patches_ref,
                         *, W, Cin, C1, c2_keep, mult):
    # 3x3 tap offsets in flattened (row-major) coordinates, tap index t = dy*3+dx.
    offs = [(dy - 1) * W + (dx - 1) for dy in range(3) for dx in range(3)]

    def shifted_tap(v, t, o):
        # result[p] = v[p + o]; circular wrap / cross-row leakage is zeroed by the
        # per-tap validity mask (this reproduces the zero padding of the convs).
        if o == 0:
            return v                                    # centre tap: mask is all-ones
        return jnp.roll(v, -o, axis=1) * mask_ref[t:t + 1]

    x = x_ref[...]                                      # (Cin, H*W)

    # ---- primary 3x3 conv as ONE MXU matmul: (C1, 9*Cin) @ (9*Cin, H*W) ----
    # im2col staging buffer: written once, read once by the matmul.
    for t, o in enumerate(offs):
        patches_ref[t * Cin:(t + 1) * Cin, :] = shifted_tap(x, t, o)
    y1 = jnp.dot(w1_ref[...], patches_ref[...], preferred_element_type=jnp.float32)
    x1 = _leaky(y1 + b1_ref[...])                       # (C1, H*W), BN1 scale pre-folded

    # ---- depthwise 3x3 (VPU), only the c2_keep channels the ghost concat keeps ----
    if mult == 1:
        x1k = x1[:c2_keep]
    else:  # general ratio: depthwise output channel c reads x1 channel c // mult
        x1k = jnp.concatenate(
            [x1[c // mult:c // mult + 1] for c in range(c2_keep)], axis=0)
    acc2 = None
    for t, o in enumerate(offs):
        term = shifted_tap(x1k, t, o) * wd_ref[:, t:t + 1]
        acc2 = term if acc2 is None else acc2 + term
    x2 = _leaky(acc2 + b2_ref[...])                     # (c2_keep, H*W)

    # ---- ghost output: disjoint channel-range stores (no concat / relayout) ----
    x_out_ref[:C1, :] = x1.astype(x_out_ref.dtype)
    x_out_ref[C1:, :] = x2.astype(x_out_ref.dtype)

    # ---- 2x2 stride-2 max pool, entirely from values: neighbour maxes via lane
    #      shifts, then gather the 2x2 top-left corners with a 0/1 selection
    #      matmul (stays lane-dense; no strided / re-read ref accesses) ----
    def pool(v):
        h = jnp.maximum(v, jnp.roll(v, -1, axis=1))     # max over columns (j, j+1)
        vm = jnp.maximum(h, jnp.roll(h, -W, axis=1))    # max over rows    (i, i+1)
        return jnp.dot(vm, sel_ref[...], preferred_element_type=jnp.float32)

    p_out_ref[:C1, :] = pool(x1).astype(p_out_ref.dtype)
    p_out_ref[C1:, :] = pool(x2).astype(p_out_ref.dtype)


def encoder_block_forward(x_nchw, params):
    N, Cin, H, W = x_nchw.shape
    assert H % 2 == 0 and W % 2 == 0, "MaxPool2d(2,2) path assumes even H, W"
    w1 = params["w1"]                 # (3, 3, Cin, C1)  HWIO
    wd = params["wd"]                 # (3, 3, 1,  C2)   HWIO depthwise
    C1, C2 = w1.shape[-1], wd.shape[-1]
    out_c = params["out_c"]
    mult = C2 // C1                   # ratio - 1
    c2_keep = out_c - C1              # x2 channels surviving the ghost concat trim
    assert 1 <= c2_keep <= C2
    HW = H * W
    Hp, Wp, HWp = H // 2, W // 2, (H // 2) * (W // 2)
    f32 = jnp.float32

    # --- fold eval-mode BatchNorm: scale into the conv weights, keep bias only ---
    inv1 = params["g1"] * jax.lax.rsqrt(params["v1"] + BN_EPS)        # (C1,)
    inv2 = params["g2"] * jax.lax.rsqrt(params["v2"] + BN_EPS)        # (C2,)
    b1 = (params["beta1"] - params["m1"] * inv1).astype(f32).reshape(C1, 1)
    b2 = (params["beta2"] - params["m2"] * inv2)[:c2_keep].astype(f32).reshape(c2_keep, 1)

    # primary conv weights -> (C1, 9*Cin), tap-major (dy, dx, ci), BN1 scale folded
    w1m = (jnp.transpose(w1, (3, 0, 1, 2)).reshape(C1, 9 * Cin) * inv1[:, None]).astype(f32)
    # depthwise weights -> (c2_keep, 9), BN2 scale folded, dropped channels trimmed
    wdm = (jnp.transpose(wd[:, :, 0, :], (2, 0, 1)).reshape(C2, 9) * inv2[:, None])
    wdm = wdm[:c2_keep].astype(f32)

    # --- per-tap validity masks (halo handled in-kernel; no HBM-side padding) ---
    rows = jnp.arange(H)[:, None]
    cols = jnp.arange(W)[None, :]
    mask = jnp.stack(
        [((rows + dy - 1 >= 0) & (rows + dy - 1 < H) &
          (cols + dx - 1 >= 0) & (cols + dx - 1 < W)).reshape(HW)
         for dy in range(3) for dx in range(3)], axis=0).astype(f32)   # (9, HW)

    # --- 0/1 selection matrix picking the 2x2 top-left corners for the pool ---
    src = (2 * jnp.arange(Hp)[:, None] * W + 2 * jnp.arange(Wp)[None, :]).reshape(HWp)
    sel = (jnp.arange(HW)[:, None] == src[None, :]).astype(f32)        # (HW, HWp)

    x_flat = x_nchw.reshape(N, Cin, HW).astype(f32)

    kernel = functools.partial(encoder_block_kernel,
                               W=W, Cin=Cin, C1=C1, c2_keep=c2_keep, mult=mult)

    # rough per-step VMEM need (double-buffered blocks + im2col scratch) -> raise
    # the scoped limit accordingly (clamped so it stays legal on v7x's 64 MiB).
    block_bytes = 4 * (Cin * HW + 9 * HW + C1 * 9 * Cin + C1 + c2_keep * 9 + c2_keep
                       + HW * HWp + out_c * HW + out_c * HWp + 9 * Cin * HW)
    vmem_limit = int(min(max(4 * block_bytes, 32 * 1024 * 1024), 64 * 1024 * 1024))

    x_out, p_out = pl.pallas_call(
        kernel,
        out_shape=(
            jax.ShapeDtypeStruct((N, out_c, HW), f32),
            jax.ShapeDtypeStruct((N, out_c, HWp), f32),
        ),
        grid_spec=pltpu.PrefetchScalarGridSpec(
            num_scalar_prefetch=0,
            grid=(N,),
            in_specs=[
                pl.BlockSpec((None, Cin, HW), lambda n: (n, 0, 0)),     # x (flat)
                pl.BlockSpec((9, HW), lambda n: (0, 0)),                # tap masks
                pl.BlockSpec((C1, 9 * Cin), lambda n: (0, 0)),          # w1 (folded)
                pl.BlockSpec((C1, 1), lambda n: (0, 0)),                # b1
                pl.BlockSpec((c2_keep, 9), lambda n: (0, 0)),           # wd (folded, trimmed)
                pl.BlockSpec((c2_keep, 1), lambda n: (0, 0)),           # b2
                pl.BlockSpec((HW, HWp), lambda n: (0, 0)),              # pool selection
            ],
            out_specs=[
                pl.BlockSpec((None, out_c, HW), lambda n: (n, 0, 0)),   # ghost x
                pl.BlockSpec((None, out_c, HWp), lambda n: (n, 0, 0)),  # pooled p
            ],
            scratch_shapes=[
                pltpu.VMEM((9 * Cin, HW), jnp.float32),                 # im2col staging
            ],
        ),
        compiler_params=pltpu.CompilerParams(
            dimension_semantics=("parallel",),   # batch is independent (v7x 2 TCs)
            vmem_limit_bytes=vmem_limit,
        ),
    )(x_flat, mask, w1m, b1, wdm, b2, sel)

    # back to PyTorch NCHW (pure reshapes, no data movement)
    return (x_out.reshape(N, out_c, H, W), p_out.reshape(N, out_c, Hp, Wp))


def reference_forward(x_nchw, params):
    """Pure-JAX reference (lax convs) for numerical verification."""
    N, Cin, H, W = x_nchw.shape
    w1, wd, out_c = params["w1"], params["wd"], params["out_c"]
    C1 = w1.shape[-1]
    x = jnp.transpose(x_nchw, (0, 2, 3, 1)).astype(jnp.float32)

    inv1 = params["g1"] / jnp.sqrt(params["v1"] + BN_EPS)
    inv2 = params["g2"] / jnp.sqrt(params["v2"] + BN_EPS)

    y1 = jax.lax.conv_general_dilated(x, w1, (1, 1), ((1, 1), (1, 1)),
                                      dimension_numbers=("NHWC", "HWIO", "NHWC"))
    y1 = _leaky(y1 * inv1 + (params["beta1"] - params["m1"] * inv1))

    y2 = jax.lax.conv_general_dilated(y1, wd, (1, 1), ((1, 1), (1, 1)),
                                      dimension_numbers=("NHWC", "HWIO", "NHWC"),
                                      feature_group_count=C1)
    y2 = _leaky(y2 * inv2 + (params["beta2"] - params["m2"] * inv2))

    ghost = jnp.concatenate([y1, y2], axis=-1)[..., :out_c]
    p = ghost.reshape(N, H // 2, 2, W // 2, 2, out_c).max(axis=(2, 4))
    return (jnp.transpose(ghost, (0, 3, 1, 2)),
            jnp.transpose(p, (0, 3, 1, 2)))


def make_params(key, in_c, out_c, ratio=2):
    C1 = math.ceil(out_c / ratio)          # init_channels
    C2 = C1 * (ratio - 1)                  # new_channels
    ks = jax.random.split(key, 12)
    return {
        "out_c": out_c,
        "w1": 0.2 * jax.random.normal(ks[0], (3, 3, in_c, C1), jnp.float32),
        "wd": 0.2 * jax.random.normal(ks[1], (3, 3, 1, C2), jnp.float32),
        "g1": jax.random.uniform(ks[2], (C1,), jnp.float32, 0.5, 1.5),
        "beta1": 0.1 * jax.random.normal(ks[3], (C1,), jnp.float32),
        "m1": 0.1 * jax.random.normal(ks[4], (C1,), jnp.float32),
        "v1": jax.random.uniform(ks[5], (C1,), jnp.float32, 0.5, 1.5),
        "g2": jax.random.uniform(ks[6], (C2,), jnp.float32, 0.5, 1.5),
        "beta2": 0.1 * jax.random.normal(ks[7], (C2,), jnp.float32),
        "m2": 0.1 * jax.random.normal(ks[8], (C2,), jnp.float32),
        "v2": jax.random.uniform(ks[9], (C2,), jnp.float32, 0.5, 1.5),
    }


if __name__ == "__main__":
    key = jax.random.PRNGKey(0)
    k_x, k_p = jax.random.split(key)

    N, in_c, H, W = 2, 4, 16, 16
    out_c = 8

    x = jax.random.normal(k_x, (N, in_c, H, W), jnp.float32)
    params = make_params(k_p, in_c, out_c)

    x_out, p_out = encoder_block_forward(x, params)
    jax.block_until_ready(x_out)
    jax.block_until_ready(p_out)

    x_ref, p_ref = reference_forward(x, params)
    assert x_out.shape == (N, out_c, H, W)
    assert p_out.shape == (N, out_c, H // 2, W // 2)
    assert jnp.allclose(x_out, x_ref, atol=2e-3, rtol=2e-3)
    assert jnp.allclose(p_out, p_ref, atol=2e-3, rtol=2e-3)

    print("KERNEL_OK")
</pallas_src>

<mosaic_0001>
module attributes {stable_mosaic.version = 11 : i64} {
  func.func @encoder_block_kernel(%arg0: i32, %arg1: memref<1x4x256xf32, #tpu.memory_space<vmem>>, %arg2: memref<9x256xf32, #tpu.memory_space<vmem>>, %arg3: memref<4x36xf32, #tpu.memory_space<vmem>>, %arg4: memref<4x1xf32, #tpu.memory_space<vmem>>, %arg5: memref<4x9xf32, #tpu.memory_space<vmem>>, %arg6: memref<4x1xf32, #tpu.memory_space<vmem>>, %arg7: memref<256x64xf32, #tpu.memory_space<vmem>>, %arg8: memref<1x8x256xf32, #tpu.memory_space<vmem>>, %arg9: memref<1x8x64xf32, #tpu.memory_space<vmem>>, %arg10: memref<36x256xf32, #tpu.memory_space<vmem>>) attributes {dimension_semantics = [#tpu.dimension_semantics<parallel>], iteration_bounds = array<i64: 2>, scalar_prefetch = 0 : i64, scratch_operands = 1 : i64, tpu.core_type = #tpu.core_type<tc>, window_params = [{transform_indices = @transform_0, window_bounds = array<i64: 1, 4, 256>}, {pipeline_mode = #tpu.pipeline_mode<synchronous>, transform_indices = @transform_1, window_bounds = array<i64: 9, 256>}, {pipeline_mode = #tpu.pipeline_mode<synchronous>, transform_indices = @transform_2, window_bounds = array<i64: 4, 36>}, {pipeline_mode = #tpu.pipeline_mode<synchronous>, transform_indices = @transform_3, window_bounds = array<i64: 4, 1>}, {pipeline_mode = #tpu.pipeline_mode<synchronous>, transform_indices = @transform_4, window_bounds = array<i64: 4, 9>}, {pipeline_mode = #tpu.pipeline_mode<synchronous>, transform_indices = @transform_5, window_bounds = array<i64: 4, 1>}, {pipeline_mode = #tpu.pipeline_mode<synchronous>, transform_indices = @transform_6, window_bounds = array<i64: 256, 64>}, {transform_indices = @transform_7, window_bounds = array<i64: 1, 8, 256>}, {transform_indices = @transform_8, window_bounds = array<i64: 1, 8, 64>}]} {
    %c0 = arith.constant 0 : index
    %c0_0 = arith.constant 0 : index
    %c0_1 = arith.constant 0 : index
    %0 = vector.load %arg1[%c0, %c0_0, %c0_1] : memref<1x4x256xf32, #tpu.memory_space<vmem>>, vector<1x4x256xf32>
    %1 = vector.shape_cast %0 : vector<1x4x256xf32> to vector<4x256xf32>
    %2 = vector.extract_strided_slice %1 {offsets = [0, 239], sizes = [4, 17], strides = [1, 1]} : vector<4x256xf32> to vector<4x17xf32>
    %3 = vector.extract_strided_slice %1 {offsets = [0, 0], sizes = [4, 239], strides = [1, 1]} : vector<4x256xf32> to vector<4x239xf32>
    %4 = tpu.concatenate %2, %3 in 1 : vector<4x17xf32>, vector<4x239xf32> -> vector<4x256xf32>
    %c0_2 = arith.constant 0 : index
    %c0_3 = arith.constant 0 : index
    %5 = vector.load %arg2[%c0_2, %c0_3] : memref<9x256xf32, #tpu.memory_space<vmem>>, vector<1x256xf32>
    %6 = vector.broadcast %5 : vector<1x256xf32> to vector<4x256xf32>
    %7 = arith.mulf %4, %6 : vector<4x256xf32>
    %c0_4 = arith.constant 0 : index
    %c0_5 = arith.constant 0 : index
    %8 = vector.load %arg10[%c0_4, %c0_5] : memref<36x256xf32, #tpu.memory_space<vmem>>, vector<4x256xf32>
    tpu.vector_store %arg10[%c0_4, %c0_5], %7 {strides = array<i32>} : memref<36x256xf32, #tpu.memory_space<vmem>>, vector<4x256xf32>,
    %9 = vector.extract_strided_slice %1 {offsets = [0, 240], sizes = [4, 16], strides = [1, 1]} : vector<4x256xf32> to vector<4x16xf32>
    %10 = vector.extract_strided_slice %1 {offsets = [0, 0], sizes = [4, 240], strides = [1, 1]} : vector<4x256xf32> to vector<4x240xf32>
    %11 = tpu.concatenate %9, %10 in 1 : vector<4x16xf32>, vector<4x240xf32> -> vector<4x256xf32>
    %c1 = arith.constant 1 : index
    %c0_6 = arith.constant 0 : index
    %12 = vector.load %arg2[%c1, %c0_6] : memref<9x256xf32, #tpu.memory_space<vmem>>, vector<1x256xf32>
    %13 = vector.broadcast %12 : vector<1x256xf32> to vector<4x256xf32>
    %14 = arith.mulf %11, %13 : vector<4x256xf32>
    %c4 = arith.constant 4 : index
    %c0_7 = arith.constant 0 : index
    %15 = vector.load %arg10[%c4, %c0_7] : memref<36x256xf32, #tpu.memory_space<vmem>>, vector<4x256xf32>
    tpu.vector_store %arg10[%c4, %c0_7], %14 {strides = array<i32>} : memref<36x256xf32, #tpu.memory_space<vmem>>, vector<4x256xf32>,
    %16 = vector.extract_strided_slice %1 {offsets = [0, 241], sizes = [4, 15], strides = [1, 1]} : vector<4x256xf32> to vector<4x15xf32>
    %17 = vector.extract_strided_slice %1 {offsets = [0, 0], sizes = [4, 241], strides = [1, 1]} : vector<4x256xf32> to vector<4x241xf32>
    %18 = tpu.concatenate %16, %17 in 1 : vector<4x15xf32>, vector<4x241xf32> -> vector<4x256xf32>
    %c2 = arith.constant 2 : index
    %c0_8 = arith.constant 0 : index
    %19 = vector.load %arg2[%c2, %c0_8] : memref<9x256xf32, #tpu.memory_space<vmem>>, vector<1x256xf32>
    %20 = vector.broadcast %19 : vector<1x256xf32> to vector<4x256xf32>
    %21 = arith.mulf %18, %20 : vector<4x256xf32>
    %c8 = arith.constant 8 : index
    %c0_9 = arith.constant 0 : index
    %22 = vector.load %arg10[%c8, %c0_9] : memref<36x256xf32, #tpu.memory_space<vmem>>, vector<4x256xf32>
    tpu.vector_store %arg10[%c8, %c0_9], %21 {strides = array<i32>} : memref<36x256xf32, #tpu.memory_space<vmem>>, vector<4x256xf32>,
    %23 = vector.extract_strided_slice %1 {offsets = [0, 255], sizes = [4, 1], strides = [1, 1]} : vector<4x256xf32> to vector<4x1xf32>
    %24 = vector.extract_strided_slice %1 {offsets = [0, 0], sizes = [4, 255], strides = [1, 1]} : vector<4x256xf32> to vector<4x255xf32>
    %25 = tpu.concatenate %23, %24 in 1 : vector<4x1xf32>, vector<4x255xf32> -> vector<4x256xf32>
    %c3 = arith.constant 3 : index
    %c0_10 = arith.constant 0 : index
    %26 = vector.load %arg2[%c3, %c0_10] : memref<9x256xf32, #tpu.memory_space<vmem>>, vector<1x256xf32>
    %27 = vector.broadcast %26 : vector<1x256xf32> to vector<4x256xf32>
    %28 = arith.mulf %25, %27 : vector<4x256xf32>
    %c12 = arith.constant 12 : index
    %c0_11 = arith.constant 0 : index
    %29 = vector.load %arg10[%c12, %c0_11] : memref<36x256xf32, #tpu.memory_space<vmem>>, vector<4x256xf32>
    tpu.vector_store %arg10[%c12, %c0_11], %28 {strides = array<i32>} : memref<36x256xf32, #tpu.memory_space<vmem>>, vector<4x256xf32>,
    %c16 = arith.constant 16 : index
    %c0_12 = arith.constant 0 : index
    %30 = vector.load %arg10[%c16, %c0_12] : memref<36x256xf32, #tpu.memory_space<vmem>>, vector<4x256xf32>
    tpu.vector_store %arg10[%c16, %c0_12], %1 {strides = array<i32>} : memref<36x256xf32, #tpu.memory_space<vmem>>, vector<4x256xf32>,
    %31 = vector.extract_strided_slice %1 {offsets = [0, 1], sizes = [4, 255], strides = [1, 1]} : vector<4x256xf32> to vector<4x255xf32>
    %32 = vector.extract_strided_slice %1 {offsets = [0, 0], sizes = [4, 1], strides = [1, 1]} : vector<4x256xf32> to vector<4x1xf32>
    %33 = tpu.concatenate %31, %32 in 1 : vector<4x255xf32>, vector<4x1xf32> -> vector<4x256xf32>
    %c5 = arith.constant 5 : index
    %c0_13 = arith.constant 0 : index
    %34 = vector.load %arg2[%c5, %c0_13] : memref<9x256xf32, #tpu.memory_space<vmem>>, vector<1x256xf32>
    %35 = vector.broadcast %34 : vector<1x256xf32> to vector<4x256xf32>
    %36 = arith.mulf %33, %35 : vector<4x256xf32>
    %c20 = arith.constant 20 : index
    %c0_14 = arith.constant 0 : index
    %37 = vector.load %arg10[%c20, %c0_14] : memref<36x256xf32, #tpu.memory_space<vmem>>, vector<4x256xf32>
    tpu.vector_store %arg10[%c20, %c0_14], %36 {strides = array<i32>} : memref<36x256xf32, #tpu.memory_space<vmem>>, vector<4x256xf32>,
    %38 = vector.extract_strided_slice %1 {offsets = [0, 15], sizes = [4, 241], strides = [1, 1]} : vector<4x256xf32> to vector<4x241xf32>
    %39 = vector.extract_strided_slice %1 {offsets = [0, 0], sizes = [4, 15], strides = [1, 1]} : vector<4x256xf32> to vector<4x15xf32>
    %40 = tpu.concatenate %38, %39 in 1 : vector<4x241xf32>, vector<4x15xf32> -> vector<4x256xf32>
    %c6 = arith.constant 6 : index
    %c0_15 = arith.constant 0 : index
    %41 = vector.load %arg2[%c6, %c0_15] : memref<9x256xf32, #tpu.memory_space<vmem>>, vector<1x256xf32>
    %42 = vector.broadcast %41 : vector<1x256xf32> to vector<4x256xf32>
    %43 = arith.mulf %40, %42 : vector<4x256xf32>
    %c24 = arith.constant 24 : index
    %c0_16 = arith.constant 0 : index
    %44 = vector.load %arg10[%c24, %c0_16] : memref<36x256xf32, #tpu.memory_space<vmem>>, vector<4x256xf32>
    tpu.vector_store %arg10[%c24, %c0_16], %43 {strides = array<i32>} : memref<36x256xf32, #tpu.memory_space<vmem>>, vector<4x256xf32>,
    %45 = vector.extract_strided_slice %1 {offsets = [0, 16], sizes = [4, 240], strides = [1, 1]} : vector<4x256xf32> to vector<4x240xf32>
    %46 = vector.extract_strided_slice %1 {offsets = [0, 0], sizes = [4, 16], strides = [1, 1]} : vector<4x256xf32> to vector<4x16xf32>
    %47 = tpu.concatenate %45, %46 in 1 : vector<4x240xf32>, vector<4x16xf32> -> vector<4x256xf32>
    %c7 = arith.constant 7 : index
    %c0_17 = arith.constant 0 : index
    %48 = vector.load %arg2[%c7, %c0_17] : memref<9x256xf32, #tpu.memory_space<vmem>>, vector<1x256xf32>
    %49 = vector.broadcast %48 : vector<1x256xf32> to vector<4x256xf32>
    %50 = arith.mulf %47, %49 : vector<4x256xf32>
    %c28 = arith.constant 28 : index
    %c0_18 = arith.constant 0 : index
    %51 = vector.load %arg10[%c28, %c0_18] : memref<36x256xf32, #tpu.memory_space<vmem>>, vector<4x256xf32>
    tpu.vector_store %arg10[%c28, %c0_18], %50 {strides = array<i32>} : memref<36x256xf32, #tpu.memory_space<vmem>>, vector<4x256xf32>,
    %52 = vector.extract_strided_slice %1 {offsets = [0, 17], sizes = [4, 239], strides = [1, 1]} : vector<4x256xf32> to vector<4x239xf32>
    %53 = vector.extract_strided_slice %1 {offsets = [0, 0], sizes = [4, 17], strides = [1, 1]} : vector<4x256xf32> to vector<4x17xf32>
    %54 = tpu.concatenate %52, %53 in 1 : vector<4x239xf32>, vector<4x17xf32> -> vector<4x256xf32>
    %c8_19 = arith.constant 8 : index
    %c0_20 = arith.constant 0 : index
    %55 = vector.load %arg2[%c8_19, %c0_20] : memref<9x256xf32, #tpu.memory_space<vmem>>, vector<1x256xf32>
    %56 = vector.broadcast %55 : vector<1x256xf32> to vector<4x256xf32>
    %57 = arith.mulf %54, %56 : vector<4x256xf32>
    %c32 = arith.constant 32 : index
    %c0_21 = arith.constant 0 : index
    %58 = vector.load %arg10[%c32, %c0_21] : memref<36x256xf32, #tpu.memory_space<vmem>>, vector<4x256xf32>
    tpu.vector_store %arg10[%c32, %c0_21], %57 {strides = array<i32>} : memref<36x256xf32, #tpu.memory_space<vmem>>, vector<4x256xf32>,
    %c0_22 = arith.constant 0 : index
    %c0_23 = arith.constant 0 : index
    %59 = vector.load %arg3[%c0_22, %c0_23] : memref<4x36xf32, #tpu.memory_space<vmem>>, vector<4x36xf32>
    %c0_24 = arith.constant 0 : index
    %c0_25 = arith.constant 0 : index
    %60 = vector.load %arg10[%c0_24, %c0_25] : memref<36x256xf32, #tpu.memory_space<vmem>>, vector<36x256xf32>
    %cst = arith.constant dense<0.000000e+00> : vector<4x256xf32>
    %61 = tpu.matmul %59, %60, %cst {dimension_numbers = #tpu.dot_dimension_numbers<[1], [0], [0], [1], [0, 0, 1, 1], [], []>} : vector<4x36xf32>, vector<36x256xf32>, vector<4x256xf32> -> vector<4x256xf32>
    %c0_26 = arith.constant 0 : index
    %c0_27 = arith.constant 0 : index
    %62 = vector.load %arg4[%c0_26, %c0_27] : memref<4x1xf32, #tpu.memory_space<vmem>>, vector<4x1xf32>
    %63 = vector.broadcast %62 : vector<4x1xf32> to vector<4x256xf32>
    %64 = arith.addf %61, %63 : vector<4x256xf32>
    %cst_28 = arith.constant 0.000000e+00 : f32
    %65 = vector.broadcast %cst_28 : f32 to vector<4x256xf32>
    %66 = arith.cmpf ogt, %64, %65 : vector<4x256xf32>
    %cst_29 = arith.constant 0.00999999977 : f32
    %67 = vector.broadcast %cst_29 : f32 to vector<4x256xf32>
    %68 = arith.mulf %67, %64 : vector<4x256xf32>
    %69 = arith.select %66, %64, %68 : vector<4x256xi1>, vector<4x256xf32>
    %70 = vector.extract_strided_slice %69 {offsets = [0, 239], sizes = [4, 17], strides = [1, 1]} : vector<4x256xf32> to vector<4x17xf32>
    %71 = vector.extract_strided_slice %69 {offsets = [0, 0], sizes = [4, 239], strides = [1, 1]} : vector<4x256xf32> to vector<4x239xf32>
    %72 = tpu.concatenate %70, %71 in 1 : vector<4x17xf32>, vector<4x239xf32> -> vector<4x256xf32>
    %c0_30 = arith.constant 0 : index
    %c0_31 = arith.constant 0 : index
    %73 = vector.load %arg2[%c0_30, %c0_31] : memref<9x256xf32, #tpu.memory_space<vmem>>, vector<1x256xf32>
    %74 = vector.broadcast %73 : vector<1x256xf32> to vector<4x256xf32>
    %75 = arith.mulf %72, %74 : vector<4x256xf32>
    %c0_32 = arith.constant 0 : index
    %c0_33 = arith.constant 0 : index
    %76 = vector.load %arg5[%c0_32, %c0_33] : memref<4x9xf32, #tpu.memory_space<vmem>>, vector<4x1xf32>
    %77 = vector.broadcast %76 : vector<4x1xf32> to vector<4x256xf32>
    %78 = arith.mulf %75, %77 : vector<4x256xf32>
    %79 = vector.extract_strided_slice %69 {offsets = [0, 240], sizes = [4, 16], strides = [1, 1]} : vector<4x256xf32> to vector<4x16xf32>
    %80 = vector.extract_strided_slice %69 {offsets = [0, 0], sizes = [4, 240], strides = [1, 1]} : vector<4x256xf32> to vector<4x240xf32>
    %81 = tpu.concatenate %79, %80 in 1 : vector<4x16xf32>, vector<4x240xf32> -> vector<4x256xf32>
    %c1_34 = arith.constant 1 : index
    %c0_35 = arith.constant 0 : index
    %82 = vector.load %arg2[%c1_34, %c0_35] : memref<9x256xf32, #tpu.memory_space<vmem>>, vector<1x256xf32>
    %83 = vector.broadcast %82 : vector<1x256xf32> to vector<4x256xf32>
    %84 = arith.mulf %81, %83 : vector<4x256xf32>
    %c0_36 = arith.constant 0 : index
    %c1_37 = arith.constant 1 : index
    %85 = vector.load %arg5[%c0_36, %c1_37] : memref<4x9xf32, #tpu.memory_space<vmem>>, vector<4x1xf32>
    %86 = vector.broadcast %85 : vector<4x1xf32> to vector<4x256xf32>
    %87 = arith.mulf %84, %86 : vector<4x256xf32>
    %88 = arith.addf %78, %87 : vector<4x256xf32>
    %89 = vector.extract_strided_slice %69 {offsets = [0, 241], sizes = [4, 15], strides = [1, 1]} : vector<4x256xf32> to vector<4x15xf32>
    %90 = vector.extract_strided_slice %69 {offsets = [0, 0], sizes = [4, 241], strides = [1, 1]} : vector<4x256xf32> to vector<4x241xf32>
    %91 = tpu.concatenate %89, %90 in 1 : vector<4x15xf32>, vector<4x241xf32> -> vector<4x256xf32>
    %c2_38 = arith.constant 2 : index
    %c0_39 = arith.constant 0 : index
    %92 = vector.load %arg2[%c2_38, %c0_39] : memref<9x256xf32, #tpu.memory_space<vmem>>, vector<1x256xf32>
    %93 = vector.broadcast %92 : vector<1x256xf32> to vector<4x256xf32>
    %94 = arith.mulf %91, %93 : vector<4x256xf32>
    %c0_40 = arith.constant 0 : index
    %c2_41 = arith.constant 2 : index
    %95 = vector.load %arg5[%c0_40, %c2_41] : memref<4x9xf32, #tpu.memory_space<vmem>>, vector<4x1xf32>
    %96 = vector.broadcast %95 : vector<4x1xf32> to vector<4x256xf32>
    %97 = arith.mulf %94, %96 : vector<4x256xf32>
    %98 = arith.addf %88, %97 : vector<4x256xf32>
    %99 = vector.extract_strided_slice %69 {offsets = [0, 255], sizes = [4, 1], strides = [1, 1]} : vector<4x256xf32> to vector<4x1xf32>
    %100 = vector.extract_strided_slice %69 {offsets = [0, 0], sizes = [4, 255], strides = [1, 1]} : vector<4x256xf32> to vector<4x255xf32>
    %101 = tpu.concatenate %99, %100 in 1 : vector<4x1xf32>, vector<4x255xf32> -> vector<4x256xf32>
    %c3_42 = arith.constant 3 : index
    %c0_43 = arith.constant 0 : index
    %102 = vector.load %arg2[%c3_42, %c0_43] : memref<9x256xf32, #tpu.memory_space<vmem>>, vector<1x256xf32>
    %103 = vector.broadcast %102 : vector<1x256xf32> to vector<4x256xf32>
    %104 = arith.mulf %101, %103 : vector<4x256xf32>
    %c0_44 = arith.constant 0 : index
    %c3_45 = arith.constant 3 : index
    %105 = vector.load %arg5[%c0_44, %c3_45] : memref<4x9xf32, #tpu.memory_space<vmem>>, vector<4x1xf32>
    %106 = vector.broadcast %105 : vector<4x1xf32> to vector<4x256xf32>
    %107 = arith.mulf %104, %106 : vector<4x256xf32>
    %108 = arith.addf %98, %107 : vector<4x256xf32>
    %c0_46 = arith.constant 0 : index
    %c4_47 = arith.constant 4 : index
    %109 = vector.load %arg5[%c0_46, %c4_47] : memref<4x9xf32, #tpu.memory_space<vmem>>, vector<4x1xf32>
    %110 = vector.broadcast %109 : vector<4x1xf32> to vector<4x256xf32>
    %111 = arith.mulf %69, %110 : vector<4x256xf32>
    %112 = arith.addf %108, %111 : vector<4x256xf32>
    %113 = vector.extract_strided_slice %69 {offsets = [0, 1], sizes = [4, 255], strides = [1, 1]} : vector<4x256xf32> to vector<4x255xf32>
    %114 = vector.extract_strided_slice %69 {offsets = [0, 0], sizes = [4, 1], strides = [1, 1]} : vector<4x256xf32> to vector<4x1xf32>
    %115 = tpu.concatenate %113, %114 in 1 : vector<4x255xf32>, vector<4x1xf32> -> vector<4x256xf32>
    %c5_48 = arith.constant 5 : index
    %c0_49 = arith.constant 0 : index
    %116 = vector.load %arg2[%c5_48, %c0_49] : memref<9x256xf32, #tpu.memory_space<vmem>>, vector<1x256xf32>
    %117 = vector.broadcast %116 : vector<1x256xf32> to vector<4x256xf32>
    %118 = arith.mulf %115, %117 : vector<4x256xf32>
    %c0_50 = arith.constant 0 : index
    %c5_51 = arith.constant 5 : index
    %119 = vector.load %arg5[%c0_50, %c5_51] : memref<4x9xf32, #tpu.memory_space<vmem>>, vector<4x1xf32>
    %120 = vector.broadcast %119 : vector<4x1xf32> to vector<4x256xf32>
    %121 = arith.mulf %118, %120 : vector<4x256xf32>
    %122 = arith.addf %112, %121 : vector<4x256xf32>
    %123 = vector.extract_strided_slice %69 {offsets = [0, 15], sizes = [4, 241], strides = [1, 1]} : vector<4x256xf32> to vector<4x241xf32>
    %124 = vector.extract_strided_slice %69 {offsets = [0, 0], sizes = [4, 15], strides = [1, 1]} : vector<4x256xf32> to vector<4x15xf32>
    %125 = tpu.concatenate %123, %124 in 1 : vector<4x241xf32>, vector<4x15xf32> -> vector<4x256xf32>
    %c6_52 = arith.constant 6 : index
    %c0_53 = arith.constant 0 : index
    %126 = vector.load %arg2[%c6_52, %c0_53] : memref<9x256xf32, #tpu.memory_space<vmem>>, vector<1x256xf32>
    %127 = vector.broadcast %126 : vector<1x256xf32> to vector<4x256xf32>
    %128 = arith.mulf %125, %127 : vector<4x256xf32>
    %c0_54 = arith.constant 0 : index
    %c6_55 = arith.constant 6 : index
    %129 = vector.load %arg5[%c0_54, %c6_55] : memref<4x9xf32, #tpu.memory_space<vmem>>, vector<4x1xf32>
    %130 = vector.broadcast %129 : vector<4x1xf32> to vector<4x256xf32>
    %131 = arith.mulf %128, %130 : vector<4x256xf32>
    %132 = arith.addf %122, %131 : vector<4x256xf32>
    %133 = vector.extract_strided_slice %69 {offsets = [0, 16], sizes = [4, 240], strides = [1, 1]} : vector<4x256xf32> to vector<4x240xf32>
    %134 = vector.extract_strided_slice %69 {offsets = [0, 0], sizes = [4, 16], strides = [1, 1]} : vector<4x256xf32> to vector<4x16xf32>
    %135 = tpu.concatenate %133, %134 in 1 : vector<4x240xf32>, vector<4x16xf32> -> vector<4x256xf32>
    %c7_56 = arith.constant 7 : index
    %c0_57 = arith.constant 0 : index
    %136 = vector.load %arg2[%c7_56, %c0_57] : memref<9x256xf32, #tpu.memory_space<vmem>>, vector<1x256xf32>
    %137 = vector.broadcast %136 : vector<1x256xf32> to vector<4x256xf32>
    %138 = arith.mulf %135, %137 : vector<4x256xf32>
    %c0_58 = arith.constant 0 : index
    %c7_59 = arith.constant 7 : index
    %139 = vector.load %arg5[%c0_58, %c7_59] : memref<4x9xf32, #tpu.memory_space<vmem>>, vector<4x1xf32>
    %140 = vector.broadcast %139 : vector<4x1xf32> to vector<4x256xf32>
    %141 = arith.mulf %138, %140 : vector<4x256xf32>
    %142 = arith.addf %132, %141 : vector<4x256xf32>
    %143 = vector.extract_strided_slice %69 {offsets = [0, 17], sizes = [4, 239], strides = [1, 1]} : vector<4x256xf32> to vector<4x239xf32>
    %144 = vector.extract_strided_slice %69 {offsets = [0, 0], sizes = [4, 17], strides = [1, 1]} : vector<4x256xf32> to vector<4x17xf32>
    %145 = tpu.concatenate %143, %144 in 1 : vector<4x239xf32>, vector<4x17xf32> -> vector<4x256xf32>
    %c8_60 = arith.constant 8 : index
    %c0_61 = arith.constant 0 : index
    %146 = vector.load %arg2[%c8_60, %c0_61] : memref<9x256xf32, #tpu.memory_space<vmem>>, vector<1x256xf32>
    %147 = vector.broadcast %146 : vector<1x256xf32> to vector<4x256xf32>
    %148 = arith.mulf %145, %147 : vector<4x256xf32>
    %c0_62 = arith.constant 0 : index
    %c8_63 = arith.constant 8 : index
    %149 = vector.load %arg5[%c0_62, %c8_63] : memref<4x9xf32, #tpu.memory_space<vmem>>, vector<4x1xf32>
    %150 = vector.broadcast %149 : vector<4x1xf32> to vector<4x256xf32>
    %151 = arith.mulf %148, %150 : vector<4x256xf32>
    %152 = arith.addf %142, %151 : vector<4x256xf32>
    %c0_64 = arith.constant 0 : index
    %c0_65 = arith.constant 0 : index
    %153 = vector.load %arg6[%c0_64, %c0_65] : memref<4x1xf32, #tpu.memory_space<vmem>>, vector<4x1xf32>
    %154 = vector.broadcast %153 : vector<4x1xf32> to vector<4x256xf32>
    %155 = arith.addf %152, %154 : vector<4x256xf32>
    %cst_66 = arith.constant 0.000000e+00 : f32
    %156 = vector.broadcast %cst_66 : f32 to vector<4x256xf32>
    %157 = arith.cmpf ogt, %155, %156 : vector<4x256xf32>
    %cst_67 = arith.constant 0.00999999977 : f32
    %158 = vector.broadcast %cst_67 : f32 to vector<4x256xf32>
    %159 = arith.mulf %158, %155 : vector<4x256xf32>
    %160 = arith.select %157, %155, %159 : vector<4x256xi1>, vector<4x256xf32>
    %c0_68 = arith.constant 0 : index
    %c0_69 = arith.constant 0 : index
    %c0_70 = arith.constant 0 : index
    %161 = vector.load %arg8[%c0_68, %c0_69, %c0_70] : memref<1x8x256xf32, #tpu.memory_space<vmem>>, vector<1x4x256xf32>
    %162 = vector.shape_cast %161 : vector<1x4x256xf32> to vector<4x256xf32>
    %163 = vector.shape_cast %69 : vector<4x256xf32> to vector<1x4x256xf32>
    tpu.vector_store %arg8[%c0_68, %c0_69, %c0_70], %163 {strides = array<i32>} : memref<1x8x256xf32, #tpu.memory_space<vmem>>, vector<1x4x256xf32>,
    %c0_71 = arith.constant 0 : index
    %c4_72 = arith.constant 4 : index
    %c0_73 = arith.constant 0 : index
    %164 = vector.load %arg8[%c0_71, %c4_72, %c0_73] : memref<1x8x256xf32, #tpu.memory_space<vmem>>, vector<1x4x256xf32>
    %165 = vector.shape_cast %164 : vector<1x4x256xf32> to vector<4x256xf32>
    %166 = vector.shape_cast %160 : vector<4x256xf32> to vector<1x4x256xf32>
    tpu.vector_store %arg8[%c0_71, %c4_72, %c0_73], %166 {strides = array<i32>} : memref<1x8x256xf32, #tpu.memory_space<vmem>>, vector<1x4x256xf32>,
    %167 = vector.extract_strided_slice %69 {offsets = [0, 1], sizes = [4, 255], strides = [1, 1]} : vector<4x256xf32> to vector<4x255xf32>
    %168 = vector.extract_strided_slice %69 {offsets = [0, 0], sizes = [4, 1], strides = [1, 1]} : vector<4x256xf32> to vector<4x1xf32>
    %169 = tpu.concatenate %167, %168 in 1 : vector<4x255xf32>, vector<4x1xf32> -> vector<4x256xf32>
    %170 = arith.maximumf %69, %169 : vector<4x256xf32>
    %171 = vector.extract_strided_slice %170 {offsets = [0, 16], sizes = [4, 240], strides = [1, 1]} : vector<4x256xf32> to vector<4x240xf32>
    %172 = vector.extract_strided_slice %170 {offsets = [0, 0], sizes = [4, 16], strides = [1, 1]} : vector<4x256xf32> to vector<4x16xf32>
    %173 = tpu.concatenate %171, %172 in 1 : vector<4x240xf32>, vector<4x16xf32> -> vector<4x256xf32>
    %174 = arith.maximumf %170, %173 : vector<4x256xf32>
    %c0_74 = arith.constant 0 : index
    %c0_75 = arith.constant 0 : index
    %175 = vector.load %arg7[%c0_74, %c0_75] : memref<256x64xf32, #tpu.memory_space<vmem>>, vector<256x64xf32>
    %cst_76 = arith.constant dense<0.000000e+00> : vector<4x64xf32>
    %176 = tpu.matmul %174, %175, %cst_76 {dimension_numbers = #tpu.dot_dimension_numbers<[1], [0], [0], [1], [0, 0, 1, 1], [], []>} : vector<4x256xf32>, vector<256x64xf32>, vector<4x64xf32> -> vector<4x64xf32>
    %c0_77 = arith.constant 0 : index
    %c0_78 = arith.constant 0 : index
    %c0_79 = arith.constant 0 : index
    %177 = vector.load %arg9[%c0_77, %c0_78, %c0_79] : memref<1x8x64xf32, #tpu.memory_space<vmem>>, vector<1x4x64xf32>
    %178 = vector.shape_cast %177 : vector<1x4x64xf32> to vector<4x64xf32>
    %179 = vector.shape_cast %176 : vector<4x64xf32> to vector<1x4x64xf32>
    tpu.vector_store %arg9[%c0_77, %c0_78, %c0_79], %179 {strides = array<i32>} : memref<1x8x64xf32, #tpu.memory_space<vmem>>, vector<1x4x64xf32>,
    %180 = vector.extract_strided_slice %160 {offsets = [0, 1], sizes = [4, 255], strides = [1, 1]} : vector<4x256xf32> to vector<4x255xf32>
    %181 = vector.extract_strided_slice %160 {offsets = [0, 0], sizes = [4, 1], strides = [1, 1]} : vector<4x256xf32> to vector<4x1xf32>
    %182 = tpu.concatenate %180, %181 in 1 : vector<4x255xf32>, vector<4x1xf32> -> vector<4x256xf32>
    %183 = arith.maximumf %160, %182 : vector<4x256xf32>
    %184 = vector.extract_strided_slice %183 {offsets = [0, 16], sizes = [4, 240], strides = [1, 1]} : vector<4x256xf32> to vector<4x240xf32>
    %185 = vector.extract_strided_slice %183 {offsets = [0, 0], sizes = [4, 16], strides = [1, 1]} : vector<4x256xf32> to vector<4x16xf32>
    %186 = tpu.concatenate %184, %185 in 1 : vector<4x240xf32>, vector<4x16xf32> -> vector<4x256xf32>
    %187 = arith.maximumf %183, %186 : vector<4x256xf32>
    %c0_80 = arith.constant 0 : index
    %c0_81 = arith.constant 0 : index
    %188 = vector.load %arg7[%c0_80, %c0_81] : memref<256x64xf32, #tpu.memory_space<vmem>>, vector<256x64xf32>
    %cst_82 = arith.constant dense<0.000000e+00> : vector<4x64xf32>
    %189 = tpu.matmul %187, %188, %cst_82 {dimension_numbers = #tpu.dot_dimension_numbers<[1], [0], [0], [1], [0, 0, 1, 1], [], []>} : vector<4x256xf32>, vector<256x64xf32>, vector<4x64xf32> -> vector<4x64xf32>
    %c0_83 = arith.constant 0 : index
    %c4_84 = arith.constant 4 : index
    %c0_85 = arith.constant 0 : index
    %190 = vector.load %arg9[%c0_83, %c4_84, %c0_85] : memref<1x8x64xf32, #tpu.memory_space<vmem>>, vector<1x4x64xf32>
    %191 = vector.shape_cast %190 : vector<1x4x64xf32> to vector<4x64xf32>
    %192 = vector.shape_cast %189 : vector<4x64xf32> to vector<1x4x64xf32>
    tpu.vector_store %arg9[%c0_83, %c4_84, %c0_85], %192 {strides = array<i32>} : memref<1x8x64xf32, #tpu.memory_space<vmem>>, vector<1x4x64xf32>,
    return
  }
  func.func @transform_0(%arg0: i32) -> (i32, i32, i32) {
    %c0_i32 = arith.constant 0 : i32
    %c0_i32_0 = arith.constant 0 : i32
    %c0_i32_1 = arith.constant 0 : i32
    return %arg0, %c0_i32, %c0_i32_0 : i32, i32, i32
  }
  func.func @transform_1(%arg0: i32) -> (i32, i32) {
    %c0_i32 = arith.constant 0 : i32
    %c0_i32_0 = arith.constant 0 : i32
    %c0_i32_1 = arith.constant 0 : i32
    return %c0_i32, %c0_i32_0 : i32, i32
  }
  func.func @transform_2(%arg0: i32) -> (i32, i32) {
    %c0_i32 = arith.constant 0 : i32
    %c0_i32_0 = arith.constant 0 : i32
    %c0_i32_1 = arith.constant 0 : i32
    return %c0_i32, %c0_i32_0 : i32, i32
  }
  func.func @transform_3(%arg0: i32) -> (i32, i32) {
    %c0_i32 = arith.constant 0 : i32
    %c0_i32_0 = arith.constant 0 : i32
    %c0_i32_1 = arith.constant 0 : i32
    return %c0_i32, %c0_i32_0 : i32, i32
  }
  func.func @transform_4(%arg0: i32) -> (i32, i32) {
    %c0_i32 = arith.constant 0 : i32
    %c0_i32_0 = arith.constant 0 : i32
    %c0_i32_1 = arith.constant 0 : i32
    return %c0_i32, %c0_i32_0 : i32, i32
  }
  func.func @transform_5(%arg0: i32) -> (i32, i32) {
    %c0_i32 = arith.constant 0 : i32
    %c0_i32_0 = arith.constant 0 : i32
    %c0_i32_1 = arith.constant 0 : i32
    return %c0_i32, %c0_i32_0 : i32, i32
  }
  func.func @transform_6(%arg0: i32) -> (i32, i32) {
    %c0_i32 = arith.constant 0 : i32
    %c0_i32_0 = arith.constant 0 : i32
    %c0_i32_1 = arith.constant 0 : i32
    return %c0_i32, %c0_i32_0 : i32, i32
  }
  func.func @transform_7(%arg0: i32) -> (i32, i32, i32) {
    %c0_i32 = arith.constant 0 : i32
    %c0_i32_0 = arith.constant 0 : i32
    %c0_i32_1 = arith.constant 0 : i32
    return %arg0, %c0_i32, %c0_i32_0 : i32, i32, i32
  }
  func.func @transform_8(%arg0: i32) -> (i32, i32, i32) {
    %c0_i32 = arith.constant 0 : i32
    %c0_i32_0 = arith.constant 0 : i32
    %c0_i32_1 = arith.constant 0 : i32
    return %arg0, %c0_i32, %c0_i32_0 : i32, i32, i32
  }
}

</mosaic_0001>

<llo_original>
// kernel: tpu_custom_call.1
$region0: #{tpu_custom_call.1}
  #allocation0 [shape = 'u32[]', space=smem, size = 0x4, offset = 0x4, fixed_abs, tag = 'smem constant byte address 0x4 - core index']
  #allocation1 [shape = 'u32[144,128]{1,0:T(1,128)}', space=vmem, size = 0x12000, scoped, tag = 'internal scratch']
  #allocation2 [shape = 'f32[36,256]{1,0:T(8,128)}', space=vmem, size = 0xa000, scoped, tag = 'scratch operand']
  %s0 = inlined_call_operand.vmem [shape: f32[2,4,256], index: 0, kind: input, shape index: {}]
  %s1 = inlined_call_operand.vmem [shape: f32[9,256], index: 1, kind: input, shape index: {}]
  %s2 = inlined_call_operand.vmem [shape: f32[4,36], index: 2, kind: input, shape index: {}]
  %s3 = inlined_call_operand.vmem [shape: f32[4,1], index: 3, kind: input, shape index: {}]
  %s4 = inlined_call_operand.vmem [shape: f32[4,9], index: 4, kind: input, shape index: {}]
  %s5 = inlined_call_operand.vmem [shape: f32[4,1], index: 5, kind: input, shape index: {}]
  %s6 = inlined_call_operand.vmem [shape: f32[256,64], index: 6, kind: input, shape index: {}]
  %s7 = inlined_call_operand.hbm [shape: f32[2,8,256], index: 7, kind: output, shape index: {0}]
  %s8 = inlined_call_operand.hbm [shape: f32[2,8,64], index: 8, kind: output, shape index: {1}]
  %9 = xla_tuple %s7, %s8
  %s10 = sld [smem:[#allocation0]]
  $region69: #{tpu_custom_call.1} parent=0
    _
  %s12 = ssub.s32 1, %s10
  %s13 = scalar_select 0, %s12, %s10
  $region1: #{tpu_custom_call.1} parent=0
    #allocation3 [shape = 'u8[16384]{0}', space=vmem, size = 0x4000, scoped, tag = 'output window, operand 0']
    #allocation4 [shape = 's32[2]{0}', space=sflag, size = 0x8, scoped, tag = 'scoped memory for tpu_custom_call.1']
    #allocation5 [shape = 'u8[8192]{0}', space=vmem, size = 0x2000, scoped, tag = 'output window, operand 1']
    #allocation6 [shape = 's32[2]{0}', space=sflag, size = 0x8, scoped, tag = 'scoped memory for tpu_custom_call.1']
    %14 = vsyncpa [#allocation4], 0
    %s15 = scalar_lea.sflag [#allocation4], 1
    %16 = vsyncpa %s15, 0
    %17 = vsyncpa [#allocation6], 0
    %s18 = scalar_lea.sflag [#allocation6], 1
    %19 = vsyncpa %s18, 0
    loop: start=0, step=1, limit=4
    $region2: #{tpu_custom_call.1} parent=1 // loop_pre_header
      _
    $region3: #{tpu_custom_call.1} parent=1 // loop_header
      %s21 = sphi 0, %s25
      %p22 = scmp.ge.s32.totalorder %s21, 4
      %s31 = sphi 0, %s33
      %s34 = sphi 0, %s31
      %s35 = sphi 0, %s34
      %s51 = sphi 0, %s35
      %s55 = sphi 0, %s55
      %s57 = sphi 0, %s55
      %s58 = sphi 0, %s57
      %s72 = sphi 0, %s58
      %s76 = sphi 0, %s76
      %s78 = sphi 0, %s76
      %s79 = sphi 0, %s78
      %s93 = sphi 0, %s79
      %s97 = sphi 0, %s97
      %s99 = sphi 0, %s97
      %s100 = sphi 0, %s99
      %s114 = sphi 0, %s100
      %s118 = sphi 0, %s118
      %s120 = sphi 0, %s118
      %s121 = sphi 0, %s120
      %s135 = sphi 0, %s121
      %s139 = sphi 0, %s139
      %s141 = sphi 0, %s139
      %s142 = sphi 0, %s141
      %s156 = sphi 0, %s142
      %s160 = sphi 0, %s160
      %s162 = sphi 0, %s160
      %s163 = sphi 0, %s162
      %s177 = sphi 0, %s163
      %s183 = sphi 0, %s185
      %s186 = sphi 0, %s183
      %s187 = sphi 0, %s186
      %s203 = sphi 0, %s187
      %s209 = sphi 0, %s211
      %s212 = sphi 0, %s209
      %s213 = sphi 0, %s212
      %s229 = sphi 0, %s213
    $region4: #{tpu_custom_call.1} parent=1 // loop_header_branch
      %24 = sbr.rel (%p22) target = $region8
    $region5: #{tpu_custom_call.1} parent=1 // loop_body
      %s26 = ssub.s32 %s21, 1
      %s27 = ssub.s32 %s21, 2
      %s28 = sadd.s32 %s21, 1
      %s29 = ssub.s32 %s21, %s28
      %p30 = scmp.eq.s32.totalorder %s29, 0
      %s32 = sadd.s32 %s31, 1
      %s33 = scalar_select %p30, %s31, %s32
      %p36 = pneg %p30
      %p37 = scmp.eq.s32.totalorder %s21, 1
      %p38 = por %p36, %p37
      %p39 = scmp.ne.s32.totalorder %s31, %s34
      %p40 = scmp.eq.s32.totalorder %s21, 0
      %p41 = por %p39, %p40
      %p42 = scmp.ne.s32.totalorder %s31, %s34
      %p43 = scmp.eq.s32.totalorder %s26, 1
      %p44 = por %p42, %p43
      %p45 = scmp.ne.s32.totalorder %s34, %s35
      %p46 = scmp.eq.s32.totalorder %s26, 0
      %p47 = por %p45, %p46
      %p48 = scmp.ne.s32.totalorder %s34, %s35
      %p49 = scmp.eq.s32.totalorder %s27, 1
      %p50 = por %p48, %p49
      %p52 = scmp.ne.s32.totalorder %s35, %s51
      %p53 = scmp.eq.s32.totalorder %s27, 0
      %p54 = por %p52, %p53
      %s56 = sadd.s32 %s55, 1
      %p59 = scmp.eq.s32.totalorder %s21, 1
      %p60 = scmp.ne.s32.totalorder %s55, %s57
      %p61 = scmp.eq.s32.totalorder %s21, 0
      %p62 = por %p60, %p61
      %p63 = scmp.ne.s32.totalorder %s55, %s57
      %p64 = scmp.eq.s32.totalorder %s26, 1
      %p65 = por %p63, %p64
      %p66 = scmp.ne.s32.totalorder %s57, %s58
      %p67 = scmp.eq.s32.totalorder %s26, 0
      %p68 = por %p66, %p67
      %p69 = scmp.ne.s32.totalorder %s57, %s58
      %p70 = scmp.eq.s32.totalorder %s27, 1
      %p71 = por %p69, %p70
      %p73 = scmp.ne.s32.totalorder %s58, %s72
      %p74 = scmp.eq.s32.totalorder %s27, 0
      %p75 = por %p73, %p74
      %s77 = sadd.s32 %s76, 1
      %p80 = scmp.eq.s32.totalorder %s21, 1
      %p81 = scmp.ne.s32.totalorder %s76, %s78
      %p82 = scmp.eq.s32.totalorder %s21, 0
      %p83 = por %p81, %p82
      %p84 = scmp.ne.s32.totalorder %s76, %s78
      %p85 = scmp.eq.s32.totalorder %s26, 1
      %p86 = por %p84, %p85
      %p87 = scmp.ne.s32.totalorder %s78, %s79
      %p88 = scmp.eq.s32.totalorder %s26, 0
      %p89 = por %p87, %p88
      %p90 = scmp.ne.s32.totalorder %s78, %s79
      %p91 = scmp.eq.s32.totalorder %s27, 1
      %p92 = por %p90, %p91
      %p94 = scmp.ne.s32.totalorder %s79, %s93
      %p95 = scmp.eq.s32.totalorder %s27, 0
      %p96 = por %p94, %p95
      %s98 = sadd.s32 %s97, 1
      %p101 = scmp.eq.s32.totalorder %s21, 1
      %p102 = scmp.ne.s32.totalorder %s97, %s99
      %p103 = scmp.eq.s32.totalorder %s21, 0
      %p104 = por %p102, %p103
      %p105 = scmp.ne.s32.totalorder %s97, %s99
      %p106 = scmp.eq.s32.totalorder %s26, 1
      %p107 = por %p105, %p106
      %p108 = scmp.ne.s32.totalorder %s99, %s100
      %p109 = scmp.eq.s32.totalorder %s26, 0
      %p110 = por %p108, %p109
      %p111 = scmp.ne.s32.totalorder %s99, %s100
      %p112 = scmp.eq.s32.totalorder %s27, 1
      %p113 = por %p111, %p112
      %p115 = scmp.ne.s32.totalorder %s100, %s114
      %p116 = scmp.eq.s32.totalorder %s27, 0
      %p117 = por %p115, %p116
      %s119 = sadd.s32 %s118, 1
      %p122 = scmp.eq.s32.totalorder %s21, 1
      %p123 = scmp.ne.s32.totalorder %s118, %s120
      %p124 = scmp.eq.s32.totalorder %s21, 0
      %p125 = por %p123, %p124
      %p126 = scmp.ne.s32.totalorder %s118, %s120
      %p127 = scmp.eq.s32.totalorder %s26, 1
      %p128 = por %p126, %p127
      %p129 = scmp.ne.s32.totalorder %s120, %s121
      %p130 = scmp.eq.s32.totalorder %s26, 0
      %p131 = por %p129, %p130
      %p132 = scmp.ne.s32.totalorder %s120, %s121
      %p133 = scmp.eq.s32.totalorder %s27, 1
      %p134 = por %p132, %p133
      %p136 = scmp.ne.s32.totalorder %s121, %s135
      %p137 = scmp.eq.s32.totalorder %s27, 0
      %p138 = por %p136, %p137
      %s140 = sadd.s32 %s139, 1
      %p143 = scmp.eq.s32.totalorder %s21, 1
      %p144 = scmp.ne.s32.totalorder %s139, %s141
      %p145 = scmp.eq.s32.totalorder %s21, 0
      %p146 = por %p144, %p145
      %p147 = scmp.ne.s32.totalorder %s139, %s141
      %p148 = scmp.eq.s32.totalorder %s26, 1
      %p149 = por %p147, %p148
      %p150 = scmp.ne.s32.totalorder %s141, %s142
      %p151 = scmp.eq.s32.totalorder %s26, 0
      %p152 = por %p150, %p151
      %p153 = scmp.ne.s32.totalorder %s141, %s142
      %p154 = scmp.eq.s32.totalorder %s27, 1
      %p155 = por %p153, %p154
      %p157 = scmp.ne.s32.totalorder %s142, %s156
      %p158 = scmp.eq.s32.totalorder %s27, 0
      %p159 = por %p157, %p158
      %s161 = sadd.s32 %s160, 1
      %p164 = scmp.eq.s32.totalorder %s21, 1
      %p165 = scmp.ne.s32.totalorder %s160, %s162
      %p166 = scmp.eq.s32.totalorder %s21, 0
      %p167 = por %p165, %p166
      %p168 = scmp.ne.s32.totalorder %s160, %s162
      %p169 = scmp.eq.s32.totalorder %s26, 1
      %p170 = por %p168, %p169
      %p171 = scmp.ne.s32.totalorder %s162, %s163
      %p172 = scmp.eq.s32.totalorder %s26, 0
      %p173 = por %p171, %p172
      %p174 = scmp.ne.s32.totalorder %s162, %s163
      %p175 = scmp.eq.s32.totalorder %s27, 1
      %p176 = por %p174, %p175
      %p178 = scmp.ne.s32.totalorder %s163, %s177
      %p179 = scmp.eq.s32.totalorder %s27, 0
      %p180 = por %p178, %p179
      %s181 = ssub.s32 %s21, %s28
      %p182 = scmp.eq.s32.totalorder %s181, 0
      %s184 = sadd.s32 %s183, 1
      %s185 = scalar_select %p182, %s183, %s184
      %p188 = pneg %p182
      %p189 = scmp.eq.s32.totalorder %s21, 1
      %p190 = por %p188, %p189
      %p191 = scmp.ne.s32.totalorder %s183, %s186
      %p192 = scmp.eq.s32.totalorder %s21, 0
      %p193 = por %p191, %p192
      %p194 = scmp.ne.s32.totalorder %s183, %s186
      %p195 = scmp.eq.s32.totalorder %s26, 1
      %p196 = por %p194, %p195
      %p197 = scmp.ne.s32.totalorder %s186, %s187
      %p198 = scmp.eq.s32.totalorder %s26, 0
      %p199 = por %p197, %p198
      %p200 = scmp.ne.s32.totalorder %s186, %s187
      %p201 = scmp.eq.s32.totalorder %s27, 1
      %p202 = por %p200, %p201
      %p204 = scmp.ne.s32.totalorder %s187, %s203
      %p205 = scmp.eq.s32.totalorder %s27, 0
      %p206 = por %p204, %p205
      %s207 = ssub.s32 %s21, %s28
      %p208 = scmp.eq.s32.totalorder %s207, 0
      %s210 = sadd.s32 %s209, 1
      %s211 = scalar_select %p208, %s209, %s210
      %p214 = pneg %p208
      %p215 = scmp.eq.s32.totalorder %s21, 1
      %p216 = por %p214, %p215
      %p217 = scmp.ne.s32.totalorder %s209, %s212
      %p218 = scmp.eq.s32.totalorder %s21, 0
      %p219 = por %p217, %p218
      %p220 = scmp.ne.s32.totalorder %s209, %s212
      %p221 = scmp.eq.s32.totalorder %s26, 1
      %p222 = por %p220, %p221
      %p223 = scmp.ne.s32.totalorder %s212, %s213
      %p224 = scmp.eq.s32.totalorder %s26, 0
      %p225 = por %p223, %p224
      %p226 = scmp.ne.s32.totalorder %s212, %s213
      %p227 = scmp.eq.s32.totalorder %s27, 1
      %p228 = por %p226, %p227
      %p230 = scmp.ne.s32.totalorder %s213, %s229
      %p231 = scmp.eq.s32.totalorder %s27, 0
      %p232 = por %p230, %p231
      %p233 = scmp.le.s32.totalorder 1, %s21
      %p234 = scmp.lt.s32.totalorder %s21, 3
      %p235 = pnand %p233, %p234
      %p236 = pneg %p235
      // Predicated region
      $region9: #{tpu_custom_call.1} parent=5 // pred_check
        _
      $region10: #{tpu_custom_call.1} parent=5 // pred_check_branch
        %238 = sbr.rel (%p235) target = $region12
      $region11: #{tpu_custom_call.1} parent=5 // pred_region
        %s239 = ssub.s32 %s21, 1
        // Predicated region
        $region13: #{tpu_custom_call.1} parent=11 // pred_check
          %p240 = pneg %p68
        $region14: #{tpu_custom_call.1} parent=11 // pred_check_branch
          %242 = sbr.rel (%p240) target = $region16
        $region15: #{tpu_custom_call.1} parent=11 // pred_region
          _
        $region16: #{tpu_custom_call.1} parent=11 // pred_fallthru
          _
        // Predicated region
        $region17: #{tpu_custom_call.1} parent=11 // pred_check
          %p243 = pneg %p89
        $region18: #{tpu_custom_call.1} parent=11 // pred_check_branch
          %245 = sbr.rel (%p243) target = $region20
        $region19: #{tpu_custom_call.1} parent=11 // pred_region
          _
        $region20: #{tpu_custom_call.1} parent=11 // pred_fallthru
          _
        // Predicated region
        $region21: #{tpu_custom_call.1} parent=11 // pred_check
          %p246 = pneg %p110
        $region22: #{tpu_custom_call.1} parent=11 // pred_check_branch
          %248 = sbr.rel (%p246) target = $region24
        $region23: #{tpu_custom_call.1} parent=11 // pred_region
          _
        $region24: #{tpu_custom_call.1} parent=11 // pred_fallthru
          _
        // Predicated region
        $region25: #{tpu_custom_call.1} parent=11 // pred_check
          %p249 = pneg %p131
        $region26: #{tpu_custom_call.1} parent=11 // pred_check_branch
          %251 = sbr.rel (%p249) target = $region28
        $region27: #{tpu_custom_call.1} parent=11 // pred_region
          _
        $region28: #{tpu_custom_call.1} parent=11 // pred_fallthru
          _
        // Predicated region
        $region29: #{tpu_custom_call.1} parent=11 // pred_check
          %p252 = pneg %p152
        $region30: #{tpu_custom_call.1} parent=11 // pred_check_branch
          %254 = sbr.rel (%p252) target = $region32
        $region31: #{tpu_custom_call.1} parent=11 // pred_region
          _
        $region32: #{tpu_custom_call.1} parent=11 // pred_fallthru
          _
        // Predicated region
        $region33: #{tpu_custom_call.1} parent=11 // pred_check
          %p255 = pneg %p173
        $region34: #{tpu_custom_call.1} parent=11 // pred_check_branch
          %257 = sbr.rel (%p255) target = $region36
        $region35: #{tpu_custom_call.1} parent=11 // pred_region
          _
        $region36: #{tpu_custom_call.1} parent=11 // pred_fallthru
          _
      $region12: #{tpu_custom_call.1} parent=5 // pred_fallthru
        _
      %p258 = scmp.lt.s32.totalorder %s21, 2
      // Predicated region
      $region37: #{tpu_custom_call.1} parent=5 // pred_check
        %p259 = pneg %p258
      $region38: #{tpu_custom_call.1} parent=5 // pred_check_branch
        %261 = sbr.rel (%p259) target = $region40
      $region39: #{tpu_custom_call.1} parent=5 // pred_region
        // Predicated region
        $region41: #{tpu_custom_call.1} parent=39 // pred_check
          %p262 = pneg %p41
        $region42: #{tpu_custom_call.1} parent=39 // pred_check_branch
          %264 = sbr.rel (%p262) target = $region44
        $region43: #{tpu_custom_call.1} parent=39 // pred_region
          %p265 = scmp.lt.s32.totalorder %s21, 1
          %s266 = scalar_select %p265, %s21, 1
          %s267 = smul.addr %s266, 2
          %s268 = smul.addr %s267, 4
          %s269 = scalar_lea.vmem %s0, %s268
        $region44: #{tpu_custom_call.1} parent=39 // pred_fallthru
          _
      $region40: #{tpu_custom_call.1} parent=5 // pred_fallthru
        _
      %p270 = scmp.le.s32.totalorder 1, %s21
      %p271 = scmp.lt.s32.totalorder %s21, 3
      %p272 = pnand %p270, %p271
      %p273 = pneg %p272
      // Predicated region
      $region45: #{tpu_custom_call.1} parent=5 // pred_check
        _
      $region46: #{tpu_custom_call.1} parent=5 // pred_check_branch
        %275 = sbr.rel (%p272) target = $region48
      $region47: #{tpu_custom_call.1} parent=5 // pred_region
        %s276 = ssub.s32 %s21, 1
        %p277 = scmp.lt.s32.totalorder %s26, 1
        %s278 = scalar_select %p277, %s26, 1
        %s279 = smul.addr %s278, 2
        %s280 = smul.addr %s279, 4
        %s281 = scalar_lea.vmem %s0, %s280
        %p282 = pneg %p47
        %p283 = pneg %p44
        %p284 = pneg %p68
        %p285 = pneg %p65
        %p286 = pneg %p89
        %p287 = pneg %p86
        %p288 = pneg %p110
        %p289 = pneg %p107
        %p290 = pneg %p131
        %p291 = pneg %p128
        %p292 = pneg %p152
        %p293 = pneg %p149
        %p294 = pneg %p173
        %p295 = pneg %p170
        %p296 = pneg %p199
        %p297 = pneg %p196
        %s298 = sand.u32 %s186, 1
        %s299 = scalar_lea.sflag [#allocation4], %s298
        %s300 = sand.u32 %s186, 1
        %s301 = smul.addr %s300, 16
        %s302 = scalar_lea.vmem [#allocation3], %s301
        %p303 = pneg %p225
        %p304 = pneg %p222
        %s305 = sand.u32 %s212, 1
        %s306 = scalar_lea.sflag [#allocation6], %s305
        %s307 = sand.u32 %s212, 1
        %s308 = smul.addr %s307, 8
        %s309 = scalar_lea.vmem [#allocation5], %s308
        %p310 = scmp.lt.s32.totalorder %s26, 1
        %s311 = scalar_select %p310, %s26, 1
        %s312 = smul.addr %s311, 2
        %s313 = smul.addr %s312, 4
        %s314 = scalar_lea.vmem %s0, %s313
        %v315 = vld [vmem:[%s314] sm:$0xff]
        %v317 = vcombine.high %v315, %v315
        %318 = vrot.lane.b32.xlu0 %v317, 17
        %v319 = vpop.permute.xlu0 %318
        %321 = vrot.lane.b32.xlu0 %v315, 17
        %v322 = vpop.permute.xlu0 %321
        %vm323 = vcmask 138240
        %v324 = vsel %vm323, %v322, %v319
        %v327 = vsel %vm323, %v319, %v322
        %v328 = vld [vmem:[%s1] ss:$8 sm:$0x3]
        %v330 = vlaneseq
        %v331 = vshrl.u32 %v330, 7
        %v332 = vsub.s32 0, %v331
        %v333 = vrot.slane %v328, %v332
        %v334 = vlaneseq
        %v335 = vshrl.u32 %v334, 7
        %v336 = vsub.s32 1, %v335
        %v337 = vrot.slane %v328, %v336
        %v340 = vmul.f32 %v327, %v333
        %v341 = vmul.f32 %v324, %v337
        %342 = vst [vmem:[#allocation2] sm:$0xf] %v340
        %343 = vst [vmem:[#allocation2 + $0x8] sm:$0xf] %v341
        %344 = vrot.lane.b32.xlu0 %v317, 16
        %v345 = vpop.permute.xlu0 %344
        %347 = vrot.lane.b32.xlu0 %v315, 16
        %v348 = vpop.permute.xlu0 %347
        %vm349 = vcmask 130048
        %v350 = vsel %vm349, %v348, %v345
        %v353 = vsel %vm349, %v345, %v348
        %s354 = scalar_lea.vmem %s1, 1
        %v355 = vld [vmem:[%s354] ss:$8 sm:$0x3]
        %v357 = vlaneseq
        %v358 = vshrl.u32 %v357, 7
        %v359 = vsub.s32 0, %v358
        %v360 = vrot.slane %v355, %v359
        %v361 = vlaneseq
        %v362 = vshrl.u32 %v361, 7
        %v363 = vsub.s32 1, %v362
        %v364 = vrot.slane %v355, %v363
        %v367 = vmul.f32 %v353, %v360
        %v368 = vmul.f32 %v350, %v364
        %v371 = vrot.slane %v367, 4
        %v372 = vrot.slane %v368, 4
        %375 = vst [vmem:[#allocation2] sm:$0xf0] %v371
        %376 = vst [vmem:[#allocation2 + $0x8] sm:$0xf0] %v372
        %377 = vrot.lane.b32.xlu0 %v317, 15
        %v378 = vpop.permute.xlu0 %377
        %380 = vrot.lane.b32.xlu0 %v315, 15
        %v381 = vpop.permute.xlu0 %380
        %vm382 = vcmask 121856
        %v383 = vsel %vm382, %v381, %v378
        %v386 = vsel %vm382, %v378, %v381
        %s387 = scalar_lea.vmem %s1, 2
        %v388 = vld [vmem:[%s387] ss:$8 sm:$0x3]
        %v390 = vlaneseq
        %v391 = vshrl.u32 %v390, 7
        %v392 = vsub.s32 0, %v391
        %v393 = vrot.slane %v388, %v392
        %v394 = vlaneseq
        %v395 = vshrl.u32 %v394, 7
        %v396 = vsub.s32 1, %v395
        %v397 = vrot.slane %v388, %v396
        %v400 = vmul.f32 %v386, %v393
        %v401 = vmul.f32 %v383, %v397
        %402 = vst [vmem:[#allocation2 + $0x10] sm:$0xf] %v400
        %403 = vst [vmem:[#allocation2 + $0x18] sm:$0xf] %v401
        %404 = vrot.lane.b32.xlu0 %v317, 1
        %v405 = vpop.permute.xlu0 %404
        %407 = vrot.lane.b32.xlu0 %v315, 1
        %v408 = vpop.permute.xlu0 %407
        %vm409 = vcmask 7168
        %v410 = vsel %vm409, %v408, %v405
        %v413 = vsel %vm409, %v405, %v408
        %s414 = scalar_lea.vmem %s1, 3
        %v415 = vld [vmem:[%s414] ss:$8 sm:$0x3]
        %v417 = vlaneseq
        %v418 = vshrl.u32 %v417, 7
        %v419 = vsub.s32 0, %v418
        %v420 = vrot.slane %v415, %v419
        %v421 = vlaneseq
        %v422 = vshrl.u32 %v421, 7
        %v423 = vsub.s32 1, %v422
        %v424 = vrot.slane %v415, %v423
        %v427 = vmul.f32 %v413, %v420
        %v428 = vmul.f32 %v410, %v424
        %v431 = vrot.slane %v427, 4
        %v432 = vrot.slane %v428, 4
        %435 = vst [vmem:[#allocation2 + $0x10] sm:$0xf0] %v431
        %436 = vst [vmem:[#allocation2 + $0x18] sm:$0xf0] %v432
        %438 = vst [vmem:[#allocation2 + $0x20] sm:$0xf] %v315
        %439 = vst [vmem:[#allocation2 + $0x28] sm:$0xf] %v317
        %440 = vrot.lane.b32.xlu0 %v315, 127
        %v441 = vpop.permute.xlu0 %440
        %442 = vrot.lane.b32.xlu0 %v317, 127
        %v443 = vpop.permute.xlu0 %442
        %vm444 = vcmask 1039360
        %v445 = vsel %vm444, %v441, %v443
        %v449 = vsel %vm444, %v443, %v441
        %s450 = scalar_lea.vmem %s1, 5
        %v451 = vld [vmem:[%s450] ss:$8 sm:$0x3]
        %v453 = vlaneseq
        %v454 = vshrl.u32 %v453, 7
        %v455 = vsub.s32 0, %v454
        %v456 = vrot.slane %v451, %v455
        %v457 = vlaneseq
        %v458 = vshrl.u32 %v457, 7
        %v459 = vsub.s32 1, %v458
        %v460 = vrot.slane %v451, %v459
        %v463 = vmul.f32 %v445, %v456
        %v464 = vmul.f32 %v449, %v460
        %v467 = vrot.slane %v463, 4
        %v468 = vrot.slane %v464, 4
        %471 = vst [vmem:[#allocation2 + $0x20] sm:$0xf0] %v467
        %472 = vst [vmem:[#allocation2 + $0x28] sm:$0xf0] %v468
        %473 = vrot.lane.b32.xlu0 %v315, 113
        %v474 = vpop.permute.xlu0 %473
        %475 = vrot.lane.b32.xlu0 %v317, 113
        %v476 = vpop.permute.xlu0 %475
        %vm477 = vcmask 924672
        %v478 = vsel %vm477, %v474, %v476
        %v482 = vsel %vm477, %v476, %v474
        %s483 = scalar_lea.vmem %s1, 6
        %v484 = vld [vmem:[%s483] ss:$8 sm:$0x3]
        %v486 = vlaneseq
        %v487 = vshrl.u32 %v486, 7
        %v488 = vsub.s32 0, %v487
        %v489 = vrot.slane %v484, %v488
        %v490 = vlaneseq
        %v491 = vshrl.u32 %v490, 7
        %v492 = vsub.s32 1, %v491
        %v493 = vrot.slane %v484, %v492
        %v496 = vmul.f32 %v478, %v489
        %v497 = vmul.f32 %v482, %v493
        %498 = vst [vmem:[#allocation2 + $0x30] sm:$0xf] %v496
        %499 = vst [vmem:[#allocation2 + $0x38] sm:$0xf] %v497
        %500 = vrot.lane.b32.xlu0 %v315, 112
        %v501 = vpop.permute.xlu0 %500
        %502 = vrot.lane.b32.xlu0 %v317, 112
        %v503 = vpop.permute.xlu0 %502
        %vm504 = vcmask 916480
        %v505 = vsel %vm504, %v501, %v503
        %v509 = vsel %vm504, %v503, %v501
        %s510 = scalar_lea.vmem %s1, 7
        %v511 = vld [vmem:[%s510] ss:$8 sm:$0x3]
        %v513 = vlaneseq
        %v514 = vshrl.u32 %v513, 7
        %v515 = vsub.s32 0, %v514
        %v516 = vrot.slane %v511, %v515
        %v517 = vlaneseq
        %v518 = vshrl.u32 %v517, 7
        %v519 = vsub.s32 1, %v518
        %v520 = vrot.slane %v511, %v519
        %v523 = vmul.f32 %v505, %v516
        %v524 = vmul.f32 %v509, %v520
        %v527 = vrot.slane %v523, 4
        %v528 = vrot.slane %v524, 4
        %531 = vst [vmem:[#allocation2 + $0x30] sm:$0xf0] %v527
        %532 = vst [vmem:[#allocation2 + $0x38] sm:$0xf0] %v528
        %533 = vrot.lane.b32.xlu0 %v315, 111
        %v534 = vpop.permute.xlu0 %533
        %535 = vrot.lane.b32.xlu0 %v317, 111
        %v536 = vpop.permute.xlu0 %535
        %vm537 = vcmask 908288
        %v538 = vsel %vm537, %v534, %v536
        %v542 = vsel %vm537, %v536, %v534
        %s543 = scalar_lea.vmem %s1, 16
        %v544 = vld [vmem:[%s543] ss:$8 sm:$0x3]
        %v546 = vlaneseq
        %v547 = vshrl.u32 %v546, 7
        %v548 = vsub.s32 0, %v547
        %v549 = vrot.slane %v544, %v548
        %v550 = vlaneseq
        %v551 = vshrl.u32 %v550, 7
        %v552 = vsub.s32 1, %v551
        %v553 = vrot.slane %v544, %v552
        %v556 = vmul.f32 %v538, %v549
        %v557 = vmul.f32 %v542, %v553
        %558 = vst [vmem:[#allocation2 + $0x40] sm:$0xf] %v556
        %559 = vst [vmem:[#allocation2 + $0x48] sm:$0xf] %v557
        %v560 = vld [vmem:[%s2] sm:$0xf]
        %v561 = vld [vmem:[#allocation2] sm:$0xff]
        %v562 = vld [vmem:[#allocation2 + $0x8] sm:$0xff]
        %v563 = vld [vmem:[#allocation2 + $0x10] sm:$0xff]
        %v564 = vld [vmem:[#allocation2 + $0x18] sm:$0xff]
        %v565 = vld [vmem:[#allocation2 + $0x20] sm:$0xff]
        %v566 = vld [vmem:[#allocation2 + $0x28] sm:$0xff]
        %v567 = vld [vmem:[#allocation2 + $0x30] sm:$0xff]
        %v568 = vld [vmem:[#allocation2 + $0x38] sm:$0xff]
        %v569 = vld [vmem:[#allocation2 + $0x40] sm:$0xf]
        %v570 = vld [vmem:[#allocation2 + $0x48] sm:$0xf]
        %v571 = vld [vmem:[%s3] sm:$0xf]
        %573 = vset.pattern.permute.xlu0 0
        %574 = vperm.xlu0 %573, %v571
        %v575 = vpop.permute.xlu0 %574
        %vm577 = vcmask 293888
        %v579 = vsel %vm577, %v560, 0
        %vm581 = vcmask 1043456
        %v583 = vsel %vm581, %v569, 0
        %v586 = vsel %vm581, %v570, 0
        %588 = vmatprep.subr.mxu0 0.0
        %589 = vmatpush1.msra.mxu0 0.0
        %590 = vmatprep.subr.mxu0 0.0
        %591 = vmatpush1.msra.mxu0 0.0
        %592 = vmatprep.subr.mxu0 0.0
        %593 = vmatpush1.msra.mxu0 0.0
        %594 = vmatprep.subr.mxu0 0.0
        %595 = vmatpush1.msra.mxu0 0.0
        %596 = vmatprep.subr.mxu0 0.0
        %597 = vmatpush1.msra.mxu0 0.0
        %598 = vmatprep.subr.mxu0 0.0
        %599 = vmatpush1.msra.mxu0 0.0
        %600 = vmatprep.subr.mxu0 0.0
        %601 = vmatpush1.msra.mxu0 0.0
        %602 = vmatprep.subr.mxu0 0.0
        %603 = vmatpush1.msra.mxu0 0.0
        %604 = vmatprep.subr.mxu0 0.0
        %605 = vmatpush1.msra.mxu0 0.0
        %606 = vmatprep.subr.mxu0 0.0
        %607 = vmatpush1.msra.mxu0 0.0
        %608 = vmatprep.subr.mxu0 0.0
        %609 = vmatpush1.msra.mxu0 0.0
        %610 = vmatprep.subr.mxu0 %v586
        %611 = vmatpush1.msra.mxu0 %v583
        %612 = vmatprep.subr.mxu0 %v568
        %613 = vmatpush1.msra.mxu0 %v567
        %614 = vmatprep.subr.mxu0 %v566
        %615 = vmatpush1.msra.mxu0 %v565
        %616 = vmatprep.subr.mxu0 %v564
        %617 = vmatpush1.msra.mxu0 %v563
        %618 = vmatprep.subr.mxu0 %v562
        %619 = vmatpush1.msra.mxu0 %v561
        %620 = vmatprep.subr.mxu0 0.0
        %621 = vmatpush2.msra.mxu0 0.0
        %622 = vmatprep.subr.mxu0 0.0
        %623 = vmatpush2.msra.mxu0 0.0
        %624 = vmatprep.subr.mxu0 0.0
        %625 = vmatpush2.msra.mxu0 0.0
        %626 = vmatprep.subr.mxu0 0.0
        %627 = vmatpush2.msra.mxu0 0.0
        %628 = vmatprep.subr.mxu0 0.0
        %629 = vmatpush2.msra.mxu0 0.0
        %630 = vmatprep.subr.mxu0 0.0
        %631 = vmatpush2.msra.mxu0 0.0
        %632 = vmatprep.subr.mxu0 0.0
        %633 = vmatpush2.msra.mxu0 0.0
        %634 = vmatprep.subr.mxu0 0.0
        %635 = vmatpush2.msra.mxu0 0.0
        %636 = vmatprep.subr.mxu0 0.0
        %637 = vmatpush2.msra.mxu0 0.0
        %638 = vmatprep.subr.mxu0 0.0
        %639 = vmatpush2.msra.mxu0 0.0
        %640 = vmatprep.subr.mxu0 0.0
        %641 = vmatpush2.msra.mxu0 0.0
        %642 = vmatprep.subr.mxu0 0.0
        %643 = vmatpush2.msra.mxu0 0.0
        %644 = vmatprep.subr.mxu0 0.0
        %645 = vmatpush2.msra.mxu0 0.0
        %646 = vmatprep.subr.mxu0 0.0
        %647 = vmatpush2.msra.mxu0 0.0
        %648 = vmatprep.subr.mxu0 0.0
        %649 = vmatpush2.msra.mxu0 0.0
        %650 = vmatprep.subr.mxu0 0.0
        %651 = vmatpush2.msra.mxu0 0.0
        %652 = vmatprep.mubr.f32.mxu0 0.0
        %653 = vmatmul.mubr.f32.gmra.mxu0 %v579
        %v654 = vpop.f32.mrf.mxu0
        %v655 = vadd.f32 %v575, %v654
        %v656 = vpop.f32.mrf.mxu0
        %v657 = vadd.f32 %v575, %v656
        %658 = vdwg.mxu0
        %vm659 = vcmp.gt.f32.partialorder %v655, 0.0
        %vm660 = vcmp.gt.f32.partialorder %v657, 0.0
        %v661 = vmul.f32 %v655, 0.01
        %v662 = vmul.f32 %v657, 0.01
        %v663 = vsel %vm659, %v655, %v661
        %v664 = vsel %vm660, %v657, %v662
        %666 = vrot.lane.b32.xlu0 %v664, 17
        %v667 = vpop.permute.xlu0 %666
        %670 = vrot.lane.b32.xlu0 %v663, 17
        %v671 = vpop.permute.xlu0 %670
        %v672 = vsel %vm323, %v671, %v667
        %v675 = vsel %vm323, %v667, %v671
        %v676 = vld [vmem:[%s1] ss:$8 sm:$0x3]
        %v678 = vlaneseq
        %v679 = vshrl.u32 %v678, 7
        %v680 = vsub.s32 0, %v679
        %v681 = vrot.slane %v676, %v680
        %v682 = vlaneseq
        %v683 = vshrl.u32 %v682, 7
        %v684 = vsub.s32 1, %v683
        %v685 = vrot.slane %v676, %v684
        %v688 = vmul.f32 %v675, %v681
        %v689 = vmul.f32 %v672, %v685
        %v690 = vld [vmem:[%s4] sm:$0xf]
        %692 = vset.pattern.permute.xlu0 0
        %693 = vperm.xlu0 %692, %v690
        %v694 = vpop.permute.xlu0 %693
        %v696 = vmul.f32 %v688, %v694
        %v697 = vmul.f32 %v689, %v694
        %698 = vrot.lane.b32.xlu0 %v664, 16
        %v699 = vpop.permute.xlu0 %698
        %701 = vrot.lane.b32.xlu0 %v663, 16
        %v702 = vpop.permute.xlu0 %701
        %v703 = vsel %vm349, %v702, %v699
        %v706 = vsel %vm349, %v699, %v702
        %v707 = vld [vmem:[%s354] ss:$8 sm:$0x3]
        %v709 = vlaneseq
        %v710 = vshrl.u32 %v709, 7
        %v711 = vsub.s32 0, %v710
        %v712 = vrot.slane %v707, %v711
        %v713 = vlaneseq
        %v714 = vshrl.u32 %v713, 7
        %v715 = vsub.s32 1, %v714
        %v716 = vrot.slane %v707, %v715
        %v719 = vmul.f32 %v706, %v712
        %v720 = vmul.f32 %v703, %v716
        %721 = vset.pattern.permute.xlu0 1
        %722 = vperm.xlu0 %721, %v690
        %v723 = vpop.permute.xlu0 %722
        %v725 = vmul.f32 %v719, %v723
        %v726 = vmul.f32 %v720, %v723
        %v727 = vadd.f32 %v696, %v725
        %v728 = vadd.f32 %v697, %v726
        %729 = vrot.lane.b32.xlu0 %v664, 15
        %v730 = vpop.permute.xlu0 %729
        %732 = vrot.lane.b32.xlu0 %v663, 15
        %v733 = vpop.permute.xlu0 %732
        %v734 = vsel %vm382, %v733, %v730
        %v737 = vsel %vm382, %v730, %v733
        %v738 = vld [vmem:[%s387] ss:$8 sm:$0x3]
        %v740 = vlaneseq
        %v741 = vshrl.u32 %v740, 7
        %v742 = vsub.s32 0, %v741
        %v743 = vrot.slane %v738, %v742
        %v744 = vlaneseq
        %v745 = vshrl.u32 %v744, 7
        %v746 = vsub.s32 1, %v745
        %v747 = vrot.slane %v738, %v746
        %v750 = vmul.f32 %v737, %v743
        %v751 = vmul.f32 %v734, %v747
        %752 = vset.pattern.permute.xlu0 2
        %753 = vperm.xlu0 %752, %v690
        %v754 = vpop.permute.xlu0 %753
        %v756 = vmul.f32 %v750, %v754
        %v757 = vmul.f32 %v751, %v754
        %v758 = vadd.f32 %v727, %v756
        %v759 = vadd.f32 %v728, %v757
        %760 = vrot.lane.b32.xlu0 %v664, 1
        %v761 = vpop.permute.xlu0 %760
        %763 = vrot.lane.b32.xlu0 %v663, 1
        %v764 = vpop.permute.xlu0 %763
        %v765 = vsel %vm409, %v764, %v761
        %v768 = vsel %vm409, %v761, %v764
        %v769 = vld [vmem:[%s414] ss:$8 sm:$0x3]
        %v771 = vlaneseq
        %v772 = vshrl.u32 %v771, 7
        %v773 = vsub.s32 0, %v772
        %v774 = vrot.slane %v769, %v773
        %v775 = vlaneseq
        %v776 = vshrl.u32 %v775, 7
        %v777 = vsub.s32 1, %v776
        %v778 = vrot.slane %v769, %v777
        %v781 = vmul.f32 %v768, %v774
        %v782 = vmul.f32 %v765, %v778
        %783 = vset.pattern.permute.xlu0 3
        %784 = vperm.xlu0 %783, %v690
        %v785 = vpop.permute.xlu0 %784
        %v787 = vmul.f32 %v781, %v785
        %v788 = vmul.f32 %v782, %v785
        %v789 = vadd.f32 %v758, %v787
        %v790 = vadd.f32 %v759, %v788
        %791 = vset.pattern.permute.xlu0 4
        %792 = vperm.xlu0 %791, %v690
        %v793 = vpop.permute.xlu0 %792
        %v795 = vmul.f32 %v663, %v793
        %v796 = vmul.f32 %v664, %v793
        %v797 = vadd.f32 %v789, %v795
        %v798 = vadd.f32 %v790, %v796
        %799 = vrot.lane.b32.xlu0 %v663, 127
        %v800 = vpop.permute.xlu0 %799
        %801 = vrot.lane.b32.xlu0 %v664, 127
        %v802 = vpop.permute.xlu0 %801
        %v803 = vsel %vm444, %v800, %v802
        %v807 = vsel %vm444, %v802, %v800
        %v808 = vld [vmem:[%s450] ss:$8 sm:$0x3]
        %v810 = vlaneseq
        %v811 = vshrl.u32 %v810, 7
        %v812 = vsub.s32 0, %v811
        %v813 = vrot.slane %v808, %v812
        %v814 = vlaneseq
        %v815 = vshrl.u32 %v814, 7
        %v816 = vsub.s32 1, %v815
        %v817 = vrot.slane %v808, %v816
        %v820 = vmul.f32 %v803, %v813
        %v821 = vmul.f32 %v807, %v817
        %822 = vset.pattern.permute.xlu0 5
        %823 = vperm.xlu0 %822, %v690
        %v824 = vpop.permute.xlu0 %823
        %v826 = vmul.f32 %v820, %v824
        %v827 = vmul.f32 %v821, %v824
        %v828 = vadd.f32 %v797, %v826
        %v829 = vadd.f32 %v798, %v827
        %830 = vrot.lane.b32.xlu0 %v663, 113
        %v831 = vpop.permute.xlu0 %830
        %832 = vrot.lane.b32.xlu0 %v664, 113
        %v833 = vpop.permute.xlu0 %832
        %v834 = vsel %vm477, %v831, %v833
        %v838 = vsel %vm477, %v833, %v831
        %v839 = vld [vmem:[%s483] ss:$8 sm:$0x3]
        %v841 = vlaneseq
        %v842 = vshrl.u32 %v841, 7
        %v843 = vsub.s32 0, %v842
        %v844 = vrot.slane %v839, %v843
        %v845 = vlaneseq
        %v846 = vshrl.u32 %v845, 7
        %v847 = vsub.s32 1, %v846
        %v848 = vrot.slane %v839, %v847
        %v851 = vmul.f32 %v834, %v844
        %v852 = vmul.f32 %v838, %v848
        %853 = vset.pattern.permute.xlu0 6
        %854 = vperm.xlu0 %853, %v690
        %v855 = vpop.permute.xlu0 %854
        %v857 = vmul.f32 %v851, %v855
        %v858 = vmul.f32 %v852, %v855
        %v859 = vadd.f32 %v828, %v857
        %v860 = vadd.f32 %v829, %v858
        %861 = vrot.lane.b32.xlu0 %v663, 112
        %v862 = vpop.permute.xlu0 %861
        %863 = vrot.lane.b32.xlu0 %v664, 112
        %v864 = vpop.permute.xlu0 %863
        %v865 = vsel %vm504, %v862, %v864
        %v869 = vsel %vm504, %v864, %v862
        %v870 = vld [vmem:[%s510] ss:$8 sm:$0x3]
        %v872 = vlaneseq
        %v873 = vshrl.u32 %v872, 7
        %v874 = vsub.s32 0, %v873
        %v875 = vrot.slane %v870, %v874
        %v876 = vlaneseq
        %v877 = vshrl.u32 %v876, 7
        %v878 = vsub.s32 1, %v877
        %v879 = vrot.slane %v870, %v878
        %v882 = vmul.f32 %v865, %v875
        %v883 = vmul.f32 %v869, %v879
        %884 = vset.pattern.permute.xlu0 7
        %885 = vperm.xlu0 %884, %v690
        %v886 = vpop.permute.xlu0 %885
        %v888 = vmul.f32 %v882, %v886
        %v889 = vmul.f32 %v883, %v886
        %v890 = vadd.f32 %v859, %v888
        %v891 = vadd.f32 %v860, %v889
        %892 = vrot.lane.b32.xlu0 %v663, 111
        %v893 = vpop.permute.xlu0 %892
        %894 = vrot.lane.b32.xlu0 %v664, 111
        %v895 = vpop.permute.xlu0 %894
        %v896 = vsel %vm537, %v893, %v895
        %v900 = vsel %vm537, %v895, %v893
        %v901 = vld [vmem:[%s543] ss:$8 sm:$0x3]
        %v903 = vlaneseq
        %v904 = vshrl.u32 %v903, 7
        %v905 = vsub.s32 0, %v904
        %v906 = vrot.slane %v901, %v905
        %v907 = vlaneseq
        %v908 = vshrl.u32 %v907, 7
        %v909 = vsub.s32 1, %v908
        %v910 = vrot.slane %v901, %v909
        %v913 = vmul.f32 %v896, %v906
        %v914 = vmul.f32 %v900, %v910
        %915 = vset.pattern.permute.xlu0 8
        %916 = vperm.xlu0 %915, %v690
        %v917 = vpop.permute.xlu0 %916
        %v919 = vmul.f32 %v913, %v917
        %v920 = vmul.f32 %v914, %v917
        %v921 = vadd.f32 %v890, %v919
        %v922 = vadd.f32 %v891, %v920
        %v923 = vld [vmem:[%s5] sm:$0xf]
        %925 = vset.pattern.permute.xlu0 0
        %926 = vperm.xlu0 %925, %v923
        %v927 = vpop.permute.xlu0 %926
        %v929 = vadd.f32 %v921, %v927
        %v930 = vadd.f32 %v922, %v927
        %vm931 = vcmp.gt.f32.partialorder %v929, 0.0
        %vm932 = vcmp.gt.f32.partialorder %v930, 0.0
        %v933 = vmul.f32 %v929, 0.01
        %v934 = vmul.f32 %v930, 0.01
        %v935 = vsel %vm931, %v929, %v933
        %v936 = vsel %vm932, %v930, %v934
        %937 = vst [vmem:[%s302] sm:$0xf] %v663
        %938 = vst [vmem:[%s302 + $0x8] sm:$0xf] %v664
        %v941 = vrot.slane %v935, 4
        %v942 = vrot.slane %v936, 4
        %945 = vst [vmem:[%s302] sm:$0xf0] %v941
        %946 = vst [vmem:[%s302 + $0x8] sm:$0xf0] %v942
        %v947 = vmax.f32 %v663, %v803
        %v948 = vmax.f32 %v664, %v807
        %951 = vrot.lane.b32.xlu0 %v947, 112
        %v952 = vpop.permute.xlu0 %951
        %953 = vrot.lane.b32.xlu0 %v948, 112
        %v954 = vpop.permute.xlu0 %953
        %v955 = vsel %vm504, %v952, %v954
        %v959 = vsel %vm504, %v954, %v952
        %v960 = vmax.f32 %v947, %v955
        %v961 = vmax.f32 %v948, %v959
        %v962 = vld [vmem:[%s6] sm:$0xff]
        %v963 = vld [vmem:[%s6 + $0x8] sm:$0xff]
        %v964 = vld [vmem:[%s6 + $0x10] sm:$0xff]
        %v965 = vld [vmem:[%s6 + $0x18] sm:$0xff]
        %v966 = vld [vmem:[%s6 + $0x20] sm:$0xff]
        %v967 = vld [vmem:[%s6 + $0x28] sm:$0xff]
        %v968 = vld [vmem:[%s6 + $0x30] sm:$0xff]
        %v969 = vld [vmem:[%s6 + $0x38] sm:$0xff]
        %v970 = vld [vmem:[%s6 + $0x40] sm:$0xff]
        %v971 = vld [vmem:[%s6 + $0x48] sm:$0xff]
        %v972 = vld [vmem:[%s6 + $0x50] sm:$0xff]
        %v973 = vld [vmem:[%s6 + $0x58] sm:$0xff]
        %v974 = vld [vmem:[%s6 + $0x60] sm:$0xff]
        %v975 = vld [vmem:[%s6 + $0x68] sm:$0xff]
        %v976 = vld [vmem:[%s6 + $0x70] sm:$0xff]
        %v977 = vld [vmem:[%s6 + $0x78] sm:$0xff]
        %v978 = vld [vmem:[%s6 + $0x80] sm:$0xff]
        %v979 = vld [vmem:[%s6 + $0x88] sm:$0xff]
        %v980 = vld [vmem:[%s6 + $0x90] sm:$0xff]
        %v981 = vld [vmem:[%s6 + $0x98] sm:$0xff]
        %v982 = vld [vmem:[%s6 + $0xa0] sm:$0xff]
        %v983 = vld [vmem:[%s6 + $0xa8] sm:$0xff]
        %v984 = vld [vmem:[%s6 + $0xb0] sm:$0xff]
        %v985 = vld [vmem:[%s6 + $0xb8] sm:$0xff]
        %v986 = vld [vmem:[%s6 + $0xc0] sm:$0xff]
        %v987 = vld [vmem:[%s6 + $0xc8] sm:$0xff]
        %v988 = vld [vmem:[%s6 + $0xd0] sm:$0xff]
        %v989 = vld [vmem:[%s6 + $0xd8] sm:$0xff]
        %v990 = vld [vmem:[%s6 + $0xe0] sm:$0xff]
        %v991 = vld [vmem:[%s6 + $0xe8] sm:$0xff]
        %v992 = vld [vmem:[%s6 + $0xf0] sm:$0xff]
        %v993 = vld [vmem:[%s6 + $0xf8] sm:$0xff]
        %994 = vmatprep.subr.mxu0 0.0
        %995 = vmatpush1.msra.mxu0 %v977
        %996 = vmatprep.subr.mxu0 0.0
        %997 = vmatpush1.msra.mxu0 %v976
        %998 = vmatprep.subr.mxu0 0.0
        %999 = vmatpush1.msra.mxu0 %v975
        %1000 = vmatprep.subr.mxu0 0.0
        %1001 = vmatpush1.msra.mxu0 %v974
        %1002 = vmatprep.subr.mxu0 0.0
        %1003 = vmatpush1.msra.mxu0 %v973
        %1004 = vmatprep.subr.mxu0 0.0
        %1005 = vmatpush1.msra.mxu0 %v972
        %1006 = vmatprep.subr.mxu0 0.0
        %1007 = vmatpush1.msra.mxu0 %v971
        %1008 = vmatprep.subr.mxu0 0.0
        %1009 = vmatpush1.msra.mxu0 %v970
        %1010 = vmatprep.subr.mxu0 0.0
        %1011 = vmatpush1.msra.mxu0 %v969
        %1012 = vmatprep.subr.mxu0 0.0
        %1013 = vmatpush1.msra.mxu0 %v968
        %1014 = vmatprep.subr.mxu0 0.0
        %1015 = vmatpush1.msra.mxu0 %v967
        %1016 = vmatprep.subr.mxu0 0.0
        %1017 = vmatpush1.msra.mxu0 %v966
        %1018 = vmatprep.subr.mxu0 0.0
        %1019 = vmatpush1.msra.mxu0 %v965
        %1020 = vmatprep.subr.mxu0 0.0
        %1021 = vmatpush1.msra.mxu0 %v964
        %1022 = vmatprep.subr.mxu0 0.0
        %1023 = vmatpush1.msra.mxu0 %v963
        %1024 = vmatprep.subr.mxu0 0.0
        %1025 = vmatpush1.msra.mxu0 %v962
        %1026 = vmatprep.subr.mxu0 0.0
        %1027 = vmatpush2.msra.mxu0 %v993
        %1028 = vmatprep.subr.mxu0 0.0
        %1029 = vmatpush2.msra.mxu0 %v992
        %1030 = vmatprep.subr.mxu0 0.0
        %1031 = vmatpush2.msra.mxu0 %v991
        %1032 = vmatprep.subr.mxu0 0.0
        %1033 = vmatpush2.msra.mxu0 %v990
        %1034 = vmatprep.subr.mxu0 0.0
        %1035 = vmatpush2.msra.mxu0 %v989
        %1036 = vmatprep.subr.mxu0 0.0
        %1037 = vmatpush2.msra.mxu0 %v988
        %1038 = vmatprep.subr.mxu0 0.0
        %1039 = vmatpush2.msra.mxu0 %v987
        %1040 = vmatprep.subr.mxu0 0.0
        %1041 = vmatpush2.msra.mxu0 %v986
        %1042 = vmatprep.subr.mxu0 0.0
        %1043 = vmatpush2.msra.mxu0 %v985
        %1044 = vmatprep.subr.mxu0 0.0
        %1045 = vmatpush2.msra.mxu0 %v984
        %1046 = vmatprep.subr.mxu0 0.0
        %1047 = vmatpush2.msra.mxu0 %v983
        %1048 = vmatprep.subr.mxu0 0.0
        %1049 = vmatpush2.msra.mxu0 %v982
        %1050 = vmatprep.subr.mxu0 0.0
        %1051 = vmatpush2.msra.mxu0 %v981
        %1052 = vmatprep.subr.mxu0 0.0
        %1053 = vmatpush2.msra.mxu0 %v980
        %1054 = vmatprep.subr.mxu0 0.0
        %1055 = vmatpush2.msra.mxu0 %v979
        %1056 = vmatprep.subr.mxu0 0.0
        %1057 = vmatpush2.msra.mxu0 %v978
        %1058 = vmatprep.mubr.f32.mxu0 %v961
        %1059 = vmatmul.mubr.f32.gmra.mxu0 %v960
        %v1060 = vpop.f32.mrf.mxu0
        %v1061 = vadd.f32 0.0, %v1060
        %v1062 = vpop.f32.mrf.mxu0
        %1063 = vdwg.mxu0
        %vm1064 = vcmask 519168
        %1065 = vst.msk [vmem:[%s309] sm:$0xf] %vm1064, %v1061
        %1066 = vrot.lane.b32.xlu0 %v935, 127
        %v1067 = vpop.permute.xlu0 %1066
        %1068 = vrot.lane.b32.xlu0 %v936, 127
        %v1069 = vpop.permute.xlu0 %1068
        %v1070 = vsel %vm444, %v1067, %v1069
        %v1074 = vsel %vm444, %v1069, %v1067
        %v1075 = vmax.f32 %v935, %v1070
        %v1076 = vmax.f32 %v936, %v1074
        %1079 = vrot.lane.b32.xlu0 %v1075, 112
        %v1080 = vpop.permute.xlu0 %1079
        %1081 = vrot.lane.b32.xlu0 %v1076, 112
        %v1082 = vpop.permute.xlu0 %1081
        %v1083 = vsel %vm504, %v1080, %v1082
        %v1087 = vsel %vm504, %v1082, %v1080
        %v1088 = vmax.f32 %v1075, %v1083
        %v1089 = vmax.f32 %v1076, %v1087
        %v1090 = vld [vmem:[%s6] sm:$0xff]
        %v1091 = vld [vmem:[%s6 + $0x8] sm:$0xff]
        %v1092 = vld [vmem:[%s6 + $0x10] sm:$0xff]
        %v1093 = vld [vmem:[%s6 + $0x18] sm:$0xff]
        %v1094 = vld [vmem:[%s6 + $0x20] sm:$0xff]
        %v1095 = vld [vmem:[%s6 + $0x28] sm:$0xff]
        %v1096 = vld [vmem:[%s6 + $0x30] sm:$0xff]
        %v1097 = vld [vmem:[%s6 + $0x38] sm:$0xff]
        %v1098 = vld [vmem:[%s6 + $0x40] sm:$0xff]
        %v1099 = vld [vmem:[%s6 + $0x48] sm:$0xff]
        %v1100 = vld [vmem:[%s6 + $0x50] sm:$0xff]
        %v1101 = vld [vmem:[%s6 + $0x58] sm:$0xff]
        %v1102 = vld [vmem:[%s6 + $0x60] sm:$0xff]
        %v1103 = vld [vmem:[%s6 + $0x68] sm:$0xff]
        %v1104 = vld [vmem:[%s6 + $0x70] sm:$0xff]
        %v1105 = vld [vmem:[%s6 + $0x78] sm:$0xff]
        %v1106 = vld [vmem:[%s6 + $0x80] sm:$0xff]
        %v1107 = vld [vmem:[%s6 + $0x88] sm:$0xff]
        %v1108 = vld [vmem:[%s6 + $0x90] sm:$0xff]
        %v1109 = vld [vmem:[%s6 + $0x98] sm:$0xff]
        %v1110 = vld [vmem:[%s6 + $0xa0] sm:$0xff]
        %v1111 = vld [vmem:[%s6 + $0xa8] sm:$0xff]
        %v1112 = vld [vmem:[%s6 + $0xb0] sm:$0xff]
        %v1113 = vld [vmem:[%s6 + $0xb8] sm:$0xff]
        %v1114 = vld [vmem:[%s6 + $0xc0] sm:$0xff]
        %v1115 = vld [vmem:[%s6 + $0xc8] sm:$0xff]
        %v1116 = vld [vmem:[%s6 + $0xd0] sm:$0xff]
        %v1117 = vld [vmem:[%s6 + $0xd8] sm:$0xff]
        %v1118 = vld [vmem:[%s6 + $0xe0] sm:$0xff]
        %v1119 = vld [vmem:[%s6 + $0xe8] sm:$0xff]
        %v1120 = vld [vmem:[%s6 + $0xf0] sm:$0xff]
        %v1121 = vld [vmem:[%s6 + $0xf8] sm:$0xff]
        %1122 = vmatprep.subr.mxu0 0.0
        %1123 = vmatpush1.msra.mxu0 %v1105
        %1124 = vmatprep.subr.mxu0 0.0
        %1125 = vmatpush1.msra.mxu0 %v1104
        %1126 = vmatprep.subr.mxu0 0.0
        %1127 = vmatpush1.msra.mxu0 %v1103
        %1128 = vmatprep.subr.mxu0 0.0
        %1129 = vmatpush1.msra.mxu0 %v1102
        %1130 = vmatprep.subr.mxu0 0.0
        %1131 = vmatpush1.msra.mxu0 %v1101
        %1132 = vmatprep.subr.mxu0 0.0
        %1133 = vmatpush1.msra.mxu0 %v1100
        %1134 = vmatprep.subr.mxu0 0.0
        %1135 = vmatpush1.msra.mxu0 %v1099
        %1136 = vmatprep.subr.mxu0 0.0
        %1137 = vmatpush1.msra.mxu0 %v1098
        %1138 = vmatprep.subr.mxu0 0.0
        %1139 = vmatpush1.msra.mxu0 %v1097
        %1140 = vmatprep.subr.mxu0 0.0
        %1141 = vmatpush1.msra.mxu0 %v1096
        %1142 = vmatprep.subr.mxu0 0.0
        %1143 = vmatpush1.msra.mxu0 %v1095
        %1144 = vmatprep.subr.mxu0 0.0
        %1145 = vmatpush1.msra.mxu0 %v1094
        %1146 = vmatprep.subr.mxu0 0.0
        %1147 = vmatpush1.msra.mxu0 %v1093
        %1148 = vmatprep.subr.mxu0 0.0
        %1149 = vmatpush1.msra.mxu0 %v1092
        %1150 = vmatprep.subr.mxu0 0.0
        %1151 = vmatpush1.msra.mxu0 %v1091
        %1152 = vmatprep.subr.mxu0 0.0
        %1153 = vmatpush1.msra.mxu0 %v1090
        %1154 = vmatprep.subr.mxu0 0.0
        %1155 = vmatpush2.msra.mxu0 %v1121
        %1156 = vmatprep.subr.mxu0 0.0
        %1157 = vmatpush2.msra.mxu0 %v1120
        %1158 = vmatprep.subr.mxu0 0.0
        %1159 = vmatpush2.msra.mxu0 %v1119
        %1160 = vmatprep.subr.mxu0 0.0
        %1161 = vmatpush2.msra.mxu0 %v1118
        %1162 = vmatprep.subr.mxu0 0.0
        %1163 = vmatpush2.msra.mxu0 %v1117
        %1164 = vmatprep.subr.mxu0 0.0
        %1165 = vmatpush2.msra.mxu0 %v1116
        %1166 = vmatprep.subr.mxu0 0.0
        %1167 = vmatpush2.msra.mxu0 %v1115
        %1168 = vmatprep.subr.mxu0 0.0
        %1169 = vmatpush2.msra.mxu0 %v1114
        %1170 = vmatprep.subr.mxu0 0.0
        %1171 = vmatpush2.msra.mxu0 %v1113
        %1172 = vmatprep.subr.mxu0 0.0
        %1173 = vmatpush2.msra.mxu0 %v1112
        %1174 = vmatprep.subr.mxu0 0.0
        %1175 = vmatpush2.msra.mxu0 %v1111
        %1176 = vmatprep.subr.mxu0 0.0
        %1177 = vmatpush2.msra.mxu0 %v1110
        %1178 = vmatprep.subr.mxu0 0.0
        %1179 = vmatpush2.msra.mxu0 %v1109
        %1180 = vmatprep.subr.mxu0 0.0
        %1181 = vmatpush2.msra.mxu0 %v1108
        %1182 = vmatprep.subr.mxu0 0.0
        %1183 = vmatpush2.msra.mxu0 %v1107
        %1184 = vmatprep.subr.mxu0 0.0
        %1185 = vmatpush2.msra.mxu0 %v1106
        %1186 = vmatprep.mubr.f32.mxu0 %v1089
        %1187 = vmatmul.mubr.f32.gmra.mxu0 %v1088
        %v1188 = vpop.f32.mrf.mxu0
        %v1189 = vadd.f32 0.0, %v1188
        %v1190 = vpop.f32.mrf.mxu0
        %1191 = vdwg.mxu0
        %1192 = vst.msk [vmem:[%s309 + $0x4] sm:$0xf] %vm1064, %v1189
        %s1193 = sand.u32 %s186, 1
        %s1194 = scalar_lea.sflag [#allocation4], %s1193
        %s1195 = sand.u32 %s186, 1
        %s1196 = smul.addr %s1195, 16
        %s1197 = scalar_lea.vmem [#allocation3], %s1196
        %s1198 = sand.u32 %s212, 1
        %s1199 = scalar_lea.sflag [#allocation6], %s1198
        %s1200 = sand.u32 %s212, 1
        %s1201 = smul.addr %s1200, 8
        %s1202 = scalar_lea.vmem [#allocation5], %s1201
        // Predicated region
        $region49: #{tpu_custom_call.1} parent=47 // pred_check
          %p1203 = pneg %p196
        $region50: #{tpu_custom_call.1} parent=47 // pred_check_branch
          %1205 = sbr.rel (%p1203) target = $region52
        $region51: #{tpu_custom_call.1} parent=47 // pred_region
          %s1207 = ssub.s32 256, 256
          %1208 = vsyncadd %s1194, %s1207
          %s1209 = smul.addr %s26, 2
          %s1210 = smul.addr %s1209, 128
          %s1211 = scalar_lea.hbm %s7, %s1210
          %s1213 = sshll.u32 %s1197, 4
          %s1214 = int_to_ptr.vmem [resolvable:$true] %s1213
          %1216 = dma.vmem_to_hbm [thread:$0]  %s1214, 256, %s1211, %s1194
        $region52: #{tpu_custom_call.1} parent=47 // pred_fallthru
          _
        // Predicated region
        $region53: #{tpu_custom_call.1} parent=47 // pred_check
          %p1217 = pneg %p222
        $region54: #{tpu_custom_call.1} parent=47 // pred_check_branch
          %1219 = sbr.rel (%p1217) target = $region56
        $region55: #{tpu_custom_call.1} parent=47 // pred_region
          %s1221 = ssub.s32 128, 128
          %1222 = vsyncadd %s1199, %s1221
          %s1223 = smul.addr %s26, 128
          %s1224 = scalar_lea.hbm %s8, %s1223
          %s1226 = sshll.u32 %s1202, 4
          %s1227 = int_to_ptr.vmem [resolvable:$true] %s1226
          %1229 = dma.vmem_to_hbm [thread:$0]  %s1227, 128, %s1224, %s1199
        $region56: #{tpu_custom_call.1} parent=47 // pred_fallthru
          _
      $region48: #{tpu_custom_call.1} parent=5 // pred_fallthru
        _
      %p1230 = scmp.le.s32.totalorder 2, %s21
      // Predicated region
      $region57: #{tpu_custom_call.1} parent=5 // pred_check
        %p1231 = pneg %p1230
      $region58: #{tpu_custom_call.1} parent=5 // pred_check_branch
        %1233 = sbr.rel (%p1231) target = $region60
      $region59: #{tpu_custom_call.1} parent=5 // pred_region
        %s1234 = ssub.s32 %s21, 2
        // Predicated region
        $region61: #{tpu_custom_call.1} parent=59 // pred_check
          %p1235 = pneg %p202
        $region62: #{tpu_custom_call.1} parent=59 // pred_check_branch
          %1237 = sbr.rel (%p1235) target = $region64
        $region63: #{tpu_custom_call.1} parent=59 // pred_region
          %s1238 = sand.u32 %s187, 1
          %s1239 = scalar_lea.sflag [#allocation4], %s1238
          %s1240 = sand.u32 %s187, 1
          %s1241 = smul.addr %s1240, 16
          %s1242 = scalar_lea.vmem [#allocation3], %s1241
          %1243 = dma.done %s1239, 256
        $region64: #{tpu_custom_call.1} parent=59 // pred_fallthru
          _
        // Predicated region
        $region65: #{tpu_custom_call.1} parent=59 // pred_check
          %p1244 = pneg %p228
        $region66: #{tpu_custom_call.1} parent=59 // pred_check_branch
          %1246 = sbr.rel (%p1244) target = $region68
        $region67: #{tpu_custom_call.1} parent=59 // pred_region
          %s1247 = sand.u32 %s213, 1
          %s1248 = scalar_lea.sflag [#allocation6], %s1247
          %s1249 = sand.u32 %s213, 1
          %s1250 = smul.addr %s1249, 8
          %s1251 = scalar_lea.vmem [#allocation5], %s1250
          %1252 = dma.done %s1248, 128
        $region68: #{tpu_custom_call.1} parent=59 // pred_fallthru
          _
      $region60: #{tpu_custom_call.1} parent=5 // pred_fallthru
        _
    $region6: #{tpu_custom_call.1} parent=1 // loop_footer
      %s25 = sadd.s32 1, %s21
    $region7: #{tpu_custom_call.1} parent=1 // loop_footer_branch
      %20 = sbr.rel target = $region3
    $region8: #{tpu_custom_call.1} parent=1 // loop_exit
      _
    %1253 = vsyncpa [#allocation4], 1
    %s1254 = scalar_lea.sflag [#allocation4], 1
    %1255 = vsyncpa %s1254, 1
    %1256 = vsyncpa [#allocation6], 1
    %s1257 = scalar_lea.sflag [#allocation6], 1
    %1258 = vsyncpa %s1257, 1

</llo_original>
